<compile_context>
chip_gen: v7x
topology: tpu7x:2x2x1
jax: 0.10.0
libtpu: 0.0.40
codegen_flags: <defaults>
</compile_context>

<pallas_src>
import functools

import jax
import jax.numpy as jnp
from jax import lax
from jax.experimental import pallas as pl
from jax.experimental.pallas import tpu as pltpu

# Lane-aligned offsets of the packed per-encoder bias vector (1, 1024):
#   [0:512]  b1   [512:768]  b2   [768:832]  b3   [896:896+2*latent]  b_head
_B1_OFF, _B2_OFF, _B3_OFF, _BH_OFF = 0, 512, 768, 896


def _rup(x, m):
    return (x + m - 1) // m * m


# -----------------------------------------------------------------------------
# Fused kernel.
# -----------------------------------------------------------------------------
def _fused_kernel(mic_feat_ref, mic_i_ref, mic_ih_ref,
                  dis_feat_ref, dis_j_ref, dis_jh_ref,
                  mw1, mw2, mw3, mwh, mb,
                  dw1, dw2, dw3, dwh, db,
                  eps_mic_ref, eps_dis_ref,
                  norm_sim_ref, loss_ref,
                  xm, xd,
                  *, n_mic, n_dis, n_pair,
                  mic_off1, mic_off2, dis_off1, dis_off2,
                  latent, tau):
    f32, bf16 = jnp.float32, jnp.bfloat16

    # ---- in-kernel stacking (groups at 8-row aligned offsets 0/off1/off2) ----
    xm[...] = jnp.zeros_like(xm)
    xm[0:n_mic, :] = mic_feat_ref[...]
    xm[mic_off1:mic_off1 + n_pair, :] = mic_i_ref[...]
    xm[mic_off2:mic_off2 + n_pair, :] = mic_ih_ref[...]

    xd[...] = jnp.zeros_like(xd)
    xd[0:n_dis, :] = dis_feat_ref[...]
    xd[dis_off1:dis_off1 + n_pair, :] = dis_j_ref[...]
    xd[dis_off2:dis_off2 + n_pair, :] = dis_jh_ref[...]

    def encode(x, w1, w2, w3, wh, bias, eps):
        # Lane-aligned slices out of the single packed bias vector.
        b1 = bias[:, _B1_OFF:_B1_OFF + 512]
        b2 = bias[:, _B2_OFF:_B2_OFF + 256]
        b3 = bias[:, _B3_OFF:_B3_OFF + 64]
        bh = bias[:, _BH_OFF:_BH_OFF + 2 * latent]
        # bf16 matmuls with f32 accumulation; bias add / ReLU in f32.
        h = jnp.dot(x.astype(bf16), w1[...], preferred_element_type=f32) + b1
        h = jnp.maximum(h, 0.0)
        h = jnp.dot(h.astype(bf16), w2[...], preferred_element_type=f32) + b2
        h = jnp.maximum(h, 0.0)
        h = jnp.dot(h.astype(bf16), w3[...], preferred_element_type=f32) + b3
        h = jnp.maximum(h, 0.0)
        # Single (64, 2*latent) head; mu / log_var are lane slices of one vreg.
        ml = jnp.dot(h.astype(bf16), wh[...], preferred_element_type=f32) + bh
        mu, log_var = ml[:, :latent], ml[:, latent:]
        # reparameterize: z = mu + eps * exp(0.5 * log_var)
        return mu + eps * jnp.exp(0.5 * log_var)

    z_mic = encode(xm[...], mw1, mw2, mw3, mwh, mb, eps_mic_ref[...])
    z_dis = encode(xd[...], dw1, dw2, dw3, dwh, db, eps_dis_ref[...])

    # Tile-aligned split of the stacked latent batches (starts at rows 0/8/16).
    mic_lat = z_mic[0:n_mic, :]
    mi      = z_mic[mic_off1:mic_off1 + n_pair, :]
    mih     = z_mic[mic_off2:mic_off2 + n_pair, :]
    dis_lat = z_dis[0:n_dis, :]
    dj      = z_dis[dis_off1:dis_off1 + n_pair, :]
    djh     = z_dis[dis_off2:dis_off2 + n_pair, :]

    # similarity_matrix = mic_lat @ dis_lat.T (contract latent dim of both).
    sim = lax.dot_general(mic_lat, dis_lat,
                          dimension_numbers=(((1,), (1,)), ((), ())),
                          preferred_element_type=f32)
    smin = jnp.min(sim)
    smax = jnp.max(sim)
    # eps guard only differs from torch in the degenerate all-equal case
    # (which is NaN there anyway).
    norm_sim_ref[...] = (sim - smin) / jnp.maximum(smax - smin, 1e-12)

    def l2norm(v):
        # F.normalize(p=2, dim=1): v / max(||v||, 1e-12)  (rsqrt -> EUP slot)
        ss = jnp.sum(v * v, axis=-1, keepdims=True)
        return v * lax.rsqrt(jnp.maximum(ss, 1e-24))

    mi_n, mih_n = l2norm(mi), l2norm(mih)
    dj_n, djh_n = l2norm(dj), l2norm(djh)

    inv_tau = 1.0 / tau
    # Row-wise dots == diag of the full normalized mm (batches line up).
    s_ij  = jnp.sum(mi_n * dj_n, axis=-1, keepdims=True)
    s_ijh = jnp.sum(mi_n * djh_n, axis=-1, keepdims=True)
    s_ihj = jnp.sum(mih_n * dj_n, axis=-1, keepdims=True)
    # -log(e^{s_ij/t} / (e^{s_ij/t} + e^{s_ijh/t} + e^{s_ihj/t}))
    #   == log(1 + e^{(s_ijh-s_ij)/t} + e^{(s_ihj-s_ij)/t})   (exact, stable)
    terms = jnp.log(1.0 + jnp.exp((s_ijh - s_ij) * inv_tau)
                        + jnp.exp((s_ihj - s_ij) * inv_tau))
    loss_ref[0, 0] = jnp.mean(terms)


# -----------------------------------------------------------------------------
# One-time parameter preparation (persistent bf16 weights + packed biases).
# -----------------------------------------------------------------------------
def prepare_encoder_params(params, latent_dim):
    """params = (w1,b1,w2,b2,w3,b3,wh,bh), weights stored (in, out), f32.
    Returns (w1,w2,w3,wh) in bf16 and one packed lane-aligned bias vector."""
    w1, b1, w2, b2, w3, b3, wh, bh = params
    width = _BH_OFF + _rup(2 * latent_dim, 128)
    packed = jnp.zeros((1, width), jnp.float32)
    packed = packed.at[:, _B1_OFF:_B1_OFF + 512].set(b1.reshape(1, -1))
    packed = packed.at[:, _B2_OFF:_B2_OFF + 256].set(b2.reshape(1, -1))
    packed = packed.at[:, _B3_OFF:_B3_OFF + 64].set(b3.reshape(1, -1))
    packed = packed.at[:, _BH_OFF:_BH_OFF + 2 * latent_dim].set(bh.reshape(1, -1))
    bf = jnp.bfloat16
    return (w1.astype(bf), w2.astype(bf), w3.astype(bf), wh.astype(bf), packed)


# -----------------------------------------------------------------------------
# Forward wrapper: single fused pallas_call, gridless, whole-array VMEM specs.
# -----------------------------------------------------------------------------
def micro_disease_v3_copy_forward(latent_dim, tau,
                                  mic_prepped, dis_prepped,
                                  mic_feature, dis_feature,
                                  mic_i, mic_i_hat, dis_j, dis_j_hat,
                                  eps_mic_all, eps_dis_all):
    n_mic, mic_dim = mic_feature.shape
    n_dis, dis_dim = dis_feature.shape
    n_pair = mic_i.shape[0]

    # 8-row aligned group offsets inside the stacked batches.
    mic_off1 = _rup(n_mic, 8)
    mic_off2 = mic_off1 + _rup(n_pair, 8)
    rows_mic = mic_off2 + _rup(n_pair, 8)
    dis_off1 = _rup(n_dis, 8)
    dis_off2 = dis_off1 + _rup(n_pair, 8)
    rows_dis = dis_off2 + _rup(n_pair, 8)

    assert eps_mic_all.shape == (rows_mic, latent_dim)
    assert eps_dis_all.shape == (rows_dis, latent_dim)

    kernel = functools.partial(
        _fused_kernel, n_mic=n_mic, n_dis=n_dis, n_pair=n_pair,
        mic_off1=mic_off1, mic_off2=mic_off2,
        dis_off1=dis_off1, dis_off2=dis_off2,
        latent=latent_dim, tau=float(tau))

    vmem = pl.BlockSpec(memory_space=pltpu.MemorySpace.VMEM)
    smem = pl.BlockSpec(memory_space=pltpu.MemorySpace.SMEM)

    norm_sim, loss = pl.pallas_call(
        kernel,
        out_shape=(jax.ShapeDtypeStruct((n_mic, n_dis), jnp.float32),
                   jax.ShapeDtypeStruct((1, 1), jnp.float32)),
        in_specs=[vmem] * 18,
        out_specs=(vmem, smem),
        scratch_shapes=[pltpu.VMEM((rows_mic, mic_dim), jnp.float32),
                        pltpu.VMEM((rows_dis, dis_dim), jnp.float32)],
    )(mic_feature, mic_i, mic_i_hat, dis_feature, dis_j, dis_j_hat,
      *mic_prepped, *dis_prepped, eps_mic_all, eps_dis_all)

    return norm_sim, loss[0, 0]


# -----------------------------------------------------------------------------
# Parameter construction (deterministic, torch.nn.Linear-style uniform init).
# Weights stored (in_features, out_features) so y = x @ W + b.
# -----------------------------------------------------------------------------
def init_linear(key, in_dim, out_dim):
    kw, kb = jax.random.split(key)
    bound = 1.0 / jnp.sqrt(in_dim)
    w = jax.random.uniform(kw, (in_dim, out_dim), jnp.float32, -bound, bound)
    b = jax.random.uniform(kb, (out_dim,), jnp.float32, -bound, bound)
    return w, b


def init_encoder(key, in_dim, latent_dim):
    dims = [(in_dim, 512), (512, 256), (256, 64), (64, 2 * latent_dim)]
    keys = jax.random.split(key, len(dims))
    params = []
    for k, (di, do) in zip(keys, dims):
        w, b = init_linear(k, di, do)
        params += [w, b]
    return tuple(params)


if __name__ == "__main__":
    # Small, module-consistent shapes.
    mic_input_dim = 96
    dis_input_dim = 80
    latent_dim = 32
    tau = 1.0
    n_mic, n_dis, n_pair = 6, 5, 4   # pair batch must match for .diag()

    key = jax.random.PRNGKey(0)
    k_mic_enc, k_dis_enc, k_in, k_eps = jax.random.split(key, 4)

    mic_params = init_encoder(k_mic_enc, mic_input_dim, latent_dim)
    dis_params = init_encoder(k_dis_enc, dis_input_dim, latent_dim)

    # One-time prep: persistent bf16 weight copies + packed bias vectors.
    mic_prepped = prepare_encoder_params(mic_params, latent_dim)
    dis_prepped = prepare_encoder_params(dis_params, latent_dim)
    jax.block_until_ready((mic_prepped, dis_prepped))

    ki = jax.random.split(k_in, 6)
    mic_feature = jax.random.normal(ki[0], (n_mic, mic_input_dim), jnp.float32)
    dis_feature = jax.random.normal(ki[1], (n_dis, dis_input_dim), jnp.float32)
    mic_i = jax.random.normal(ki[2], (n_pair, mic_input_dim), jnp.float32)
    mic_i_hat = jax.random.normal(ki[3], (n_pair, mic_input_dim), jnp.float32)
    dis_j = jax.random.normal(ki[4], (n_pair, dis_input_dim), jnp.float32)
    dis_j_hat = jax.random.normal(ki[5], (n_pair, dis_input_dim), jnp.float32)

    # eps (the module's randn_like) is generated directly in the padded
    # stacked layout: one array per encoder, no concat anywhere.
    rows_mic = _rup(n_mic, 8) + 2 * _rup(n_pair, 8)
    rows_dis = _rup(n_dis, 8) + 2 * _rup(n_pair, 8)
    ke = jax.random.split(k_eps, 2)
    eps_mic_all = jax.random.normal(ke[0], (rows_mic, latent_dim), jnp.float32)
    eps_dis_all = jax.random.normal(ke[1], (rows_dis, latent_dim), jnp.float32)

    fwd = jax.jit(functools.partial(micro_disease_v3_copy_forward,
                                    latent_dim, tau))

    norm_sim, loss = fwd(mic_prepped, dis_prepped,
                         mic_feature, dis_feature, mic_i, mic_i_hat,
                         dis_j, dis_j_hat, eps_mic_all, eps_dis_all)
    jax.block_until_ready((norm_sim, loss))

    assert norm_sim.shape == (n_mic, n_dis)
    assert loss.shape == ()
    assert bool(jnp.all(jnp.isfinite(norm_sim)))
    assert bool(jnp.isfinite(loss))
    print("KERNEL_OK")
</pallas_src>

<mosaic_0001>
module attributes {stable_mosaic.version = 11 : i64} {
  func.func @_fused_kernel(%arg0: memref<6x96xf32, #tpu.memory_space<vmem>>, %arg1: memref<4x96xf32, #tpu.memory_space<vmem>>, %arg2: memref<4x96xf32, #tpu.memory_space<vmem>>, %arg3: memref<5x80xf32, #tpu.memory_space<vmem>>, %arg4: memref<4x80xf32, #tpu.memory_space<vmem>>, %arg5: memref<4x80xf32, #tpu.memory_space<vmem>>, %arg6: memref<96x512xbf16, #tpu.memory_space<vmem>>, %arg7: memref<512x256xbf16, #tpu.memory_space<vmem>>, %arg8: memref<256x64xbf16, #tpu.memory_space<vmem>>, %arg9: memref<64x64xbf16, #tpu.memory_space<vmem>>, %arg10: memref<1x1024xf32, #tpu.memory_space<vmem>>, %arg11: memref<80x512xbf16, #tpu.memory_space<vmem>>, %arg12: memref<512x256xbf16, #tpu.memory_space<vmem>>, %arg13: memref<256x64xbf16, #tpu.memory_space<vmem>>, %arg14: memref<64x64xbf16, #tpu.memory_space<vmem>>, %arg15: memref<1x1024xf32, #tpu.memory_space<vmem>>, %arg16: memref<24x32xf32, #tpu.memory_space<vmem>>, %arg17: memref<24x32xf32, #tpu.memory_space<vmem>>, %arg18: memref<6x5xf32, #tpu.memory_space<vmem>>, %arg19: memref<1x1xf32, #tpu.memory_space<smem>>, %arg20: memref<24x96xf32, #tpu.memory_space<vmem>>, %arg21: memref<24x80xf32, #tpu.memory_space<vmem>>) attributes {dimension_semantics = [], scalar_prefetch = 0 : i64, scratch_operands = 2 : i64, tpu.core_type = #tpu.core_type<tc>} {
    %cst = arith.constant 0.000000e+00 : f32
    %0 = vector.broadcast %cst : f32 to vector<24x96xf32>
    %c0 = arith.constant 0 : index
    %c0_0 = arith.constant 0 : index
    %1 = vector.load %arg20[%c0, %c0_0] : memref<24x96xf32, #tpu.memory_space<vmem>>, vector<24x96xf32>
    tpu.vector_store %arg20[%c0, %c0_0], %0 {strides = array<i32>} : memref<24x96xf32, #tpu.memory_space<vmem>>, vector<24x96xf32>,
    %c0_1 = arith.constant 0 : index
    %c0_2 = arith.constant 0 : index
    %2 = vector.load %arg0[%c0_1, %c0_2] : memref<6x96xf32, #tpu.memory_space<vmem>>, vector<6x96xf32>
    %c0_3 = arith.constant 0 : index
    %c0_4 = arith.constant 0 : index
    %3 = vector.load %arg20[%c0_3, %c0_4] : memref<24x96xf32, #tpu.memory_space<vmem>>, vector<6x96xf32>
    tpu.vector_store %arg20[%c0_3, %c0_4], %2 {strides = array<i32>} : memref<24x96xf32, #tpu.memory_space<vmem>>, vector<6x96xf32>,
    %c0_5 = arith.constant 0 : index
    %c0_6 = arith.constant 0 : index
    %4 = vector.load %arg1[%c0_5, %c0_6] : memref<4x96xf32, #tpu.memory_space<vmem>>, vector<4x96xf32>
    %c8 = arith.constant 8 : index
    %c0_7 = arith.constant 0 : index
    %5 = vector.load %arg20[%c8, %c0_7] : memref<24x96xf32, #tpu.memory_space<vmem>>, vector<4x96xf32>
    tpu.vector_store %arg20[%c8, %c0_7], %4 {strides = array<i32>} : memref<24x96xf32, #tpu.memory_space<vmem>>, vector<4x96xf32>,
    %c0_8 = arith.constant 0 : index
    %c0_9 = arith.constant 0 : index
    %6 = vector.load %arg2[%c0_8, %c0_9] : memref<4x96xf32, #tpu.memory_space<vmem>>, vector<4x96xf32>
    %c16 = arith.constant 16 : index
    %c0_10 = arith.constant 0 : index
    %7 = vector.load %arg20[%c16, %c0_10] : memref<24x96xf32, #tpu.memory_space<vmem>>, vector<4x96xf32>
    tpu.vector_store %arg20[%c16, %c0_10], %6 {strides = array<i32>} : memref<24x96xf32, #tpu.memory_space<vmem>>, vector<4x96xf32>,
    %cst_11 = arith.constant 0.000000e+00 : f32
    %8 = vector.broadcast %cst_11 : f32 to vector<24x80xf32>
    %c0_12 = arith.constant 0 : index
    %c0_13 = arith.constant 0 : index
    %9 = vector.load %arg21[%c0_12, %c0_13] : memref<24x80xf32, #tpu.memory_space<vmem>>, vector<24x80xf32>
    tpu.vector_store %arg21[%c0_12, %c0_13], %8 {strides = array<i32>} : memref<24x80xf32, #tpu.memory_space<vmem>>, vector<24x80xf32>,
    %c0_14 = arith.constant 0 : index
    %c0_15 = arith.constant 0 : index
    %10 = vector.load %arg3[%c0_14, %c0_15] : memref<5x80xf32, #tpu.memory_space<vmem>>, vector<5x80xf32>
    %c0_16 = arith.constant 0 : index
    %c0_17 = arith.constant 0 : index
    %11 = vector.load %arg21[%c0_16, %c0_17] : memref<24x80xf32, #tpu.memory_space<vmem>>, vector<5x80xf32>
    tpu.vector_store %arg21[%c0_16, %c0_17], %10 {strides = array<i32>} : memref<24x80xf32, #tpu.memory_space<vmem>>, vector<5x80xf32>,
    %c0_18 = arith.constant 0 : index
    %c0_19 = arith.constant 0 : index
    %12 = vector.load %arg4[%c0_18, %c0_19] : memref<4x80xf32, #tpu.memory_space<vmem>>, vector<4x80xf32>
    %c8_20 = arith.constant 8 : index
    %c0_21 = arith.constant 0 : index
    %13 = vector.load %arg21[%c8_20, %c0_21] : memref<24x80xf32, #tpu.memory_space<vmem>>, vector<4x80xf32>
    tpu.vector_store %arg21[%c8_20, %c0_21], %12 {strides = array<i32>} : memref<24x80xf32, #tpu.memory_space<vmem>>, vector<4x80xf32>,
    %c0_22 = arith.constant 0 : index
    %c0_23 = arith.constant 0 : index
    %14 = vector.load %arg5[%c0_22, %c0_23] : memref<4x80xf32, #tpu.memory_space<vmem>>, vector<4x80xf32>
    %c16_24 = arith.constant 16 : index
    %c0_25 = arith.constant 0 : index
    %15 = vector.load %arg21[%c16_24, %c0_25] : memref<24x80xf32, #tpu.memory_space<vmem>>, vector<4x80xf32>
    tpu.vector_store %arg21[%c16_24, %c0_25], %14 {strides = array<i32>} : memref<24x80xf32, #tpu.memory_space<vmem>>, vector<4x80xf32>,
    %c0_26 = arith.constant 0 : index
    %c0_27 = arith.constant 0 : index
    %16 = vector.load %arg20[%c0_26, %c0_27] : memref<24x96xf32, #tpu.memory_space<vmem>>, vector<24x96xf32>
    %c0_28 = arith.constant 0 : index
    %c0_29 = arith.constant 0 : index
    %17 = vector.load %arg16[%c0_28, %c0_29] : memref<24x32xf32, #tpu.memory_space<vmem>>, vector<24x32xf32>
    %c0_30 = arith.constant 0 : index
    %c0_31 = arith.constant 0 : index
    %18 = vector.load %arg10[%c0_30, %c0_31] : memref<1x1024xf32, #tpu.memory_space<vmem>>, vector<1x512xf32>
    %c0_32 = arith.constant 0 : index
    %c512 = arith.constant 512 : index
    %19 = vector.load %arg10[%c0_32, %c512] : memref<1x1024xf32, #tpu.memory_space<vmem>>, vector<1x256xf32>
    %c0_33 = arith.constant 0 : index
    %c768 = arith.constant 768 : index
    %20 = vector.load %arg10[%c0_33, %c768] : memref<1x1024xf32, #tpu.memory_space<vmem>>, vector<1x64xf32>
    %c0_34 = arith.constant 0 : index
    %c896 = arith.constant 896 : index
    %21 = vector.load %arg10[%c0_34, %c896] : memref<1x1024xf32, #tpu.memory_space<vmem>>, vector<1x64xf32>
    %22 = arith.truncf %16 : vector<24x96xf32> to vector<24x96xbf16>
    %c0_35 = arith.constant 0 : index
    %c0_36 = arith.constant 0 : index
    %23 = vector.load %arg6[%c0_35, %c0_36] : memref<96x512xbf16, #tpu.memory_space<vmem>>, vector<96x512xbf16>
    %cst_37 = arith.constant dense<0.000000e+00> : vector<24x512xf32>
    %24 = tpu.matmul %22, %23, %cst_37 {dimension_numbers = #tpu.dot_dimension_numbers<[1], [0], [0], [1], [0, 0, 1, 1], [], []>} : vector<24x96xbf16>, vector<96x512xbf16>, vector<24x512xf32> -> vector<24x512xf32>
    %25 = vector.broadcast %18 : vector<1x512xf32> to vector<24x512xf32>
    %26 = arith.addf %24, %25 : vector<24x512xf32>
    %cst_38 = arith.constant 0.000000e+00 : f32
    %27 = vector.broadcast %cst_38 : f32 to vector<24x512xf32>
    %28 = arith.maximumf %26, %27 : vector<24x512xf32>
    %29 = arith.truncf %28 : vector<24x512xf32> to vector<24x512xbf16>
    %c0_39 = arith.constant 0 : index
    %c0_40 = arith.constant 0 : index
    %30 = vector.load %arg7[%c0_39, %c0_40] : memref<512x256xbf16, #tpu.memory_space<vmem>>, vector<512x256xbf16>
    %cst_41 = arith.constant dense<0.000000e+00> : vector<24x256xf32>
    %31 = tpu.matmul %29, %30, %cst_41 {dimension_numbers = #tpu.dot_dimension_numbers<[1], [0], [0], [1], [0, 0, 1, 1], [], []>} : vector<24x512xbf16>, vector<512x256xbf16>, vector<24x256xf32> -> vector<24x256xf32>
    %32 = vector.broadcast %19 : vector<1x256xf32> to vector<24x256xf32>
    %33 = arith.addf %31, %32 : vector<24x256xf32>
    %cst_42 = arith.constant 0.000000e+00 : f32
    %34 = vector.broadcast %cst_42 : f32 to vector<24x256xf32>
    %35 = arith.maximumf %33, %34 : vector<24x256xf32>
    %36 = arith.truncf %35 : vector<24x256xf32> to vector<24x256xbf16>
    %c0_43 = arith.constant 0 : index
    %c0_44 = arith.constant 0 : index
    %37 = vector.load %arg8[%c0_43, %c0_44] : memref<256x64xbf16, #tpu.memory_space<vmem>>, vector<256x64xbf16>
    %cst_45 = arith.constant dense<0.000000e+00> : vector<24x64xf32>
    %38 = tpu.matmul %36, %37, %cst_45 {dimension_numbers = #tpu.dot_dimension_numbers<[1], [0], [0], [1], [0, 0, 1, 1], [], []>} : vector<24x256xbf16>, vector<256x64xbf16>, vector<24x64xf32> -> vector<24x64xf32>
    %39 = vector.broadcast %20 : vector<1x64xf32> to vector<24x64xf32>
    %40 = arith.addf %38, %39 : vector<24x64xf32>
    %cst_46 = arith.constant 0.000000e+00 : f32
    %41 = vector.broadcast %cst_46 : f32 to vector<24x64xf32>
    %42 = arith.maximumf %40, %41 : vector<24x64xf32>
    %43 = arith.truncf %42 : vector<24x64xf32> to vector<24x64xbf16>
    %c0_47 = arith.constant 0 : index
    %c0_48 = arith.constant 0 : index
    %44 = vector.load %arg9[%c0_47, %c0_48] : memref<64x64xbf16, #tpu.memory_space<vmem>>, vector<64x64xbf16>
    %cst_49 = arith.constant dense<0.000000e+00> : vector<24x64xf32>
    %45 = tpu.matmul %43, %44, %cst_49 {dimension_numbers = #tpu.dot_dimension_numbers<[1], [0], [0], [1], [0, 0, 1, 1], [], []>} : vector<24x64xbf16>, vector<64x64xbf16>, vector<24x64xf32> -> vector<24x64xf32>
    %46 = vector.broadcast %21 : vector<1x64xf32> to vector<24x64xf32>
    %47 = arith.addf %45, %46 : vector<24x64xf32>
    %48 = vector.extract_strided_slice %47 {offsets = [0, 0], sizes = [24, 32], strides = [1, 1]} : vector<24x64xf32> to vector<24x32xf32>
    %49 = vector.extract_strided_slice %47 {offsets = [0, 32], sizes = [24, 32], strides = [1, 1]} : vector<24x64xf32> to vector<24x32xf32>
    %cst_50 = arith.constant 5.000000e-01 : f32
    %50 = vector.broadcast %cst_50 : f32 to vector<24x32xf32>
    %51 = arith.mulf %50, %49 : vector<24x32xf32>
    %52 = math.exp %51 : vector<24x32xf32>
    %53 = arith.mulf %17, %52 : vector<24x32xf32>
    %54 = arith.addf %48, %53 : vector<24x32xf32>
    %c0_51 = arith.constant 0 : index
    %c0_52 = arith.constant 0 : index
    %55 = vector.load %arg21[%c0_51, %c0_52] : memref<24x80xf32, #tpu.memory_space<vmem>>, vector<24x80xf32>
    %c0_53 = arith.constant 0 : index
    %c0_54 = arith.constant 0 : index
    %56 = vector.load %arg17[%c0_53, %c0_54] : memref<24x32xf32, #tpu.memory_space<vmem>>, vector<24x32xf32>
    %c0_55 = arith.constant 0 : index
    %c0_56 = arith.constant 0 : index
    %57 = vector.load %arg15[%c0_55, %c0_56] : memref<1x1024xf32, #tpu.memory_space<vmem>>, vector<1x512xf32>
    %c0_57 = arith.constant 0 : index
    %c512_58 = arith.constant 512 : index
    %58 = vector.load %arg15[%c0_57, %c512_58] : memref<1x1024xf32, #tpu.memory_space<vmem>>, vector<1x256xf32>
    %c0_59 = arith.constant 0 : index
    %c768_60 = arith.constant 768 : index
    %59 = vector.load %arg15[%c0_59, %c768_60] : memref<1x1024xf32, #tpu.memory_space<vmem>>, vector<1x64xf32>
    %c0_61 = arith.constant 0 : index
    %c896_62 = arith.constant 896 : index
    %60 = vector.load %arg15[%c0_61, %c896_62] : memref<1x1024xf32, #tpu.memory_space<vmem>>, vector<1x64xf32>
    %61 = arith.truncf %55 : vector<24x80xf32> to vector<24x80xbf16>
    %c0_63 = arith.constant 0 : index
    %c0_64 = arith.constant 0 : index
    %62 = vector.load %arg11[%c0_63, %c0_64] : memref<80x512xbf16, #tpu.memory_space<vmem>>, vector<80x512xbf16>
    %cst_65 = arith.constant dense<0.000000e+00> : vector<24x512xf32>
    %63 = tpu.matmul %61, %62, %cst_65 {dimension_numbers = #tpu.dot_dimension_numbers<[1], [0], [0], [1], [0, 0, 1, 1], [], []>} : vector<24x80xbf16>, vector<80x512xbf16>, vector<24x512xf32> -> vector<24x512xf32>
    %64 = vector.broadcast %57 : vector<1x512xf32> to vector<24x512xf32>
    %65 = arith.addf %63, %64 : vector<24x512xf32>
    %cst_66 = arith.constant 0.000000e+00 : f32
    %66 = vector.broadcast %cst_66 : f32 to vector<24x512xf32>
    %67 = arith.maximumf %65, %66 : vector<24x512xf32>
    %68 = arith.truncf %67 : vector<24x512xf32> to vector<24x512xbf16>
    %c0_67 = arith.constant 0 : index
    %c0_68 = arith.constant 0 : index
    %69 = vector.load %arg12[%c0_67, %c0_68] : memref<512x256xbf16, #tpu.memory_space<vmem>>, vector<512x256xbf16>
    %cst_69 = arith.constant dense<0.000000e+00> : vector<24x256xf32>
    %70 = tpu.matmul %68, %69, %cst_69 {dimension_numbers = #tpu.dot_dimension_numbers<[1], [0], [0], [1], [0, 0, 1, 1], [], []>} : vector<24x512xbf16>, vector<512x256xbf16>, vector<24x256xf32> -> vector<24x256xf32>
    %71 = vector.broadcast %58 : vector<1x256xf32> to vector<24x256xf32>
    %72 = arith.addf %70, %71 : vector<24x256xf32>
    %cst_70 = arith.constant 0.000000e+00 : f32
    %73 = vector.broadcast %cst_70 : f32 to vector<24x256xf32>
    %74 = arith.maximumf %72, %73 : vector<24x256xf32>
    %75 = arith.truncf %74 : vector<24x256xf32> to vector<24x256xbf16>
    %c0_71 = arith.constant 0 : index
    %c0_72 = arith.constant 0 : index
    %76 = vector.load %arg13[%c0_71, %c0_72] : memref<256x64xbf16, #tpu.memory_space<vmem>>, vector<256x64xbf16>
    %cst_73 = arith.constant dense<0.000000e+00> : vector<24x64xf32>
    %77 = tpu.matmul %75, %76, %cst_73 {dimension_numbers = #tpu.dot_dimension_numbers<[1], [0], [0], [1], [0, 0, 1, 1], [], []>} : vector<24x256xbf16>, vector<256x64xbf16>, vector<24x64xf32> -> vector<24x64xf32>
    %78 = vector.broadcast %59 : vector<1x64xf32> to vector<24x64xf32>
    %79 = arith.addf %77, %78 : vector<24x64xf32>
    %cst_74 = arith.constant 0.000000e+00 : f32
    %80 = vector.broadcast %cst_74 : f32 to vector<24x64xf32>
    %81 = arith.maximumf %79, %80 : vector<24x64xf32>
    %82 = arith.truncf %81 : vector<24x64xf32> to vector<24x64xbf16>
    %c0_75 = arith.constant 0 : index
    %c0_76 = arith.constant 0 : index
    %83 = vector.load %arg14[%c0_75, %c0_76] : memref<64x64xbf16, #tpu.memory_space<vmem>>, vector<64x64xbf16>
    %cst_77 = arith.constant dense<0.000000e+00> : vector<24x64xf32>
    %84 = tpu.matmul %82, %83, %cst_77 {dimension_numbers = #tpu.dot_dimension_numbers<[1], [0], [0], [1], [0, 0, 1, 1], [], []>} : vector<24x64xbf16>, vector<64x64xbf16>, vector<24x64xf32> -> vector<24x64xf32>
    %85 = vector.broadcast %60 : vector<1x64xf32> to vector<24x64xf32>
    %86 = arith.addf %84, %85 : vector<24x64xf32>
    %87 = vector.extract_strided_slice %86 {offsets = [0, 0], sizes = [24, 32], strides = [1, 1]} : vector<24x64xf32> to vector<24x32xf32>
    %88 = vector.extract_strided_slice %86 {offsets = [0, 32], sizes = [24, 32], strides = [1, 1]} : vector<24x64xf32> to vector<24x32xf32>
    %cst_78 = arith.constant 5.000000e-01 : f32
    %89 = vector.broadcast %cst_78 : f32 to vector<24x32xf32>
    %90 = arith.mulf %89, %88 : vector<24x32xf32>
    %91 = math.exp %90 : vector<24x32xf32>
    %92 = arith.mulf %56, %91 : vector<24x32xf32>
    %93 = arith.addf %87, %92 : vector<24x32xf32>
    %94 = vector.extract_strided_slice %54 {offsets = [0, 0], sizes = [6, 32], strides = [1, 1]} : vector<24x32xf32> to vector<6x32xf32>
    %95 = vector.extract_strided_slice %54 {offsets = [8, 0], sizes = [4, 32], strides = [1, 1]} : vector<24x32xf32> to vector<4x32xf32>
    %96 = vector.extract_strided_slice %54 {offsets = [16, 0], sizes = [4, 32], strides = [1, 1]} : vector<24x32xf32> to vector<4x32xf32>
    %97 = vector.extract_strided_slice %93 {offsets = [0, 0], sizes = [5, 32], strides = [1, 1]} : vector<24x32xf32> to vector<5x32xf32>
    %98 = vector.extract_strided_slice %93 {offsets = [8, 0], sizes = [4, 32], strides = [1, 1]} : vector<24x32xf32> to vector<4x32xf32>
    %99 = vector.extract_strided_slice %93 {offsets = [16, 0], sizes = [4, 32], strides = [1, 1]} : vector<24x32xf32> to vector<4x32xf32>
    %cst_79 = arith.constant dense<0.000000e+00> : vector<6x5xf32>
    %100 = tpu.matmul %94, %97, %cst_79 {dimension_numbers = #tpu.dot_dimension_numbers<[1], [1], [0], [0], [0, 0, 1, 0], [], []>} : vector<6x32xf32>, vector<5x32xf32>, vector<6x5xf32> -> vector<6x5xf32>
    %101 = vector.shape_cast %100 : vector<6x5xf32> to vector<1x6x5xf32>
    %cst_80 = arith.constant dense<0x7F800000> : vector<1xf32>
    %102 = vector.multi_reduction <minimumf>, %101, %cst_80 [1, 2] : vector<1x6x5xf32> to vector<1xf32>
    %103 = vector.shape_cast %102 : vector<1xf32> to vector<1x1x1xf32>
    %104 = vector.extract %103[0, 0, 0] : f32 from vector<1x1x1xf32>
    %105 = vector.shape_cast %100 : vector<6x5xf32> to vector<1x6x5xf32>
    %cst_81 = arith.constant dense<0xFF800000> : vector<1xf32>
    %106 = vector.multi_reduction <maximumf>, %105, %cst_81 [1, 2] : vector<1x6x5xf32> to vector<1xf32>
    %107 = vector.shape_cast %106 : vector<1xf32> to vector<1x1x1xf32>
    %108 = vector.extract %107[0, 0, 0] : f32 from vector<1x1x1xf32>
    %109 = vector.broadcast %104 : f32 to vector<6x5xf32>
    %110 = arith.subf %100, %109 : vector<6x5xf32>
    %111 = arith.subf %108, %104 : f32
    %cst_82 = arith.constant 9.99999996E-13 : f32
    %112 = arith.maximumf %111, %cst_82 : f32
    %113 = vector.broadcast %112 : f32 to vector<6x5xf32>
    %114 = arith.divf %110, %113 : vector<6x5xf32>
    %c0_83 = arith.constant 0 : index
    %c0_84 = arith.constant 0 : index
    %115 = vector.load %arg18[%c0_83, %c0_84] : memref<6x5xf32, #tpu.memory_space<vmem>>, vector<6x5xf32>
    tpu.vector_store %arg18[%c0_83, %c0_84], %114 {strides = array<i32>} : memref<6x5xf32, #tpu.memory_space<vmem>>, vector<6x5xf32>,
    %116 = arith.mulf %95, %95 : vector<4x32xf32>
    %cst_85 = arith.constant dense<0.000000e+00> : vector<4xf32>
    %117 = vector.multi_reduction <add>, %116, %cst_85 [1] : vector<4x32xf32> to vector<4xf32>
    %118 = vector.shape_cast %117 : vector<4xf32> to vector<4x1xf32>
    %cst_86 = arith.constant 1.000000e-24 : f32
    %119 = vector.broadcast %cst_86 : f32 to vector<4x1xf32>
    %120 = arith.maximumf %118, %119 : vector<4x1xf32>
    %121 = math.rsqrt %120 : vector<4x1xf32>
    %122 = vector.broadcast %121 : vector<4x1xf32> to vector<4x32xf32>
    %123 = arith.mulf %95, %122 : vector<4x32xf32>
    %124 = arith.mulf %96, %96 : vector<4x32xf32>
    %cst_87 = arith.constant dense<0.000000e+00> : vector<4xf32>
    %125 = vector.multi_reduction <add>, %124, %cst_87 [1] : vector<4x32xf32> to vector<4xf32>
    %126 = vector.shape_cast %125 : vector<4xf32> to vector<4x1xf32>
    %cst_88 = arith.constant 1.000000e-24 : f32
    %127 = vector.broadcast %cst_88 : f32 to vector<4x1xf32>
    %128 = arith.maximumf %126, %127 : vector<4x1xf32>
    %129 = math.rsqrt %128 : vector<4x1xf32>
    %130 = vector.broadcast %129 : vector<4x1xf32> to vector<4x32xf32>
    %131 = arith.mulf %96, %130 : vector<4x32xf32>
    %132 = arith.mulf %98, %98 : vector<4x32xf32>
    %cst_89 = arith.constant dense<0.000000e+00> : vector<4xf32>
    %133 = vector.multi_reduction <add>, %132, %cst_89 [1] : vector<4x32xf32> to vector<4xf32>
    %134 = vector.shape_cast %133 : vector<4xf32> to vector<4x1xf32>
    %cst_90 = arith.constant 1.000000e-24 : f32
    %135 = vector.broadcast %cst_90 : f32 to vector<4x1xf32>
    %136 = arith.maximumf %134, %135 : vector<4x1xf32>
    %137 = math.rsqrt %136 : vector<4x1xf32>
    %138 = vector.broadcast %137 : vector<4x1xf32> to vector<4x32xf32>
    %139 = arith.mulf %98, %138 : vector<4x32xf32>
    %140 = arith.mulf %99, %99 : vector<4x32xf32>
    %cst_91 = arith.constant dense<0.000000e+00> : vector<4xf32>
    %141 = vector.multi_reduction <add>, %140, %cst_91 [1] : vector<4x32xf32> to vector<4xf32>
    %142 = vector.shape_cast %141 : vector<4xf32> to vector<4x1xf32>
    %cst_92 = arith.constant 1.000000e-24 : f32
    %143 = vector.broadcast %cst_92 : f32 to vector<4x1xf32>
    %144 = arith.maximumf %142, %143 : vector<4x1xf32>
    %145 = math.rsqrt %144 : vector<4x1xf32>
    %146 = vector.broadcast %145 : vector<4x1xf32> to vector<4x32xf32>
    %147 = arith.mulf %99, %146 : vector<4x32xf32>
    %148 = arith.mulf %123, %139 : vector<4x32xf32>
    %cst_93 = arith.constant dense<0.000000e+00> : vector<4xf32>
    %149 = vector.multi_reduction <add>, %148, %cst_93 [1] : vector<4x32xf32> to vector<4xf32>
    %150 = vector.shape_cast %149 : vector<4xf32> to vector<4x1xf32>
    %151 = arith.mulf %123, %147 : vector<4x32xf32>
    %cst_94 = arith.constant dense<0.000000e+00> : vector<4xf32>
    %152 = vector.multi_reduction <add>, %151, %cst_94 [1] : vector<4x32xf32> to vector<4xf32>
    %153 = vector.shape_cast %152 : vector<4xf32> to vector<4x1xf32>
    %154 = arith.mulf %131, %139 : vector<4x32xf32>
    %cst_95 = arith.constant dense<0.000000e+00> : vector<4xf32>
    %155 = vector.multi_reduction <add>, %154, %cst_95 [1] : vector<4x32xf32> to vector<4xf32>
    %156 = vector.shape_cast %155 : vector<4xf32> to vector<4x1xf32>
    %157 = arith.subf %153, %150 : vector<4x1xf32>
    %cst_96 = arith.constant 1.000000e+00 : f32
    %158 = vector.broadcast %cst_96 : f32 to vector<4x1xf32>
    %159 = arith.mulf %157, %158 : vector<4x1xf32>
    %160 = math.exp %159 : vector<4x1xf32>
    %cst_97 = arith.constant 1.000000e+00 : f32
    %161 = vector.broadcast %cst_97 : f32 to vector<4x1xf32>
    %162 = arith.addf %161, %160 : vector<4x1xf32>
    %163 = arith.subf %156, %150 : vector<4x1xf32>
    %cst_98 = arith.constant 1.000000e+00 : f32
    %164 = vector.broadcast %cst_98 : f32 to vector<4x1xf32>
    %165 = arith.mulf %163, %164 : vector<4x1xf32>
    %166 = math.exp %165 : vector<4x1xf32>
    %167 = arith.addf %162, %166 : vector<4x1xf32>
    %168 = math.log %167 : vector<4x1xf32>
    %169 = vector.shape_cast %168 : vector<4x1xf32> to vector<1x4x1xf32>
    %cst_99 = arith.constant dense<0.000000e+00> : vector<1xf32>
    %170 = vector.multi_reduction <add>, %169, %cst_99 [1, 2] : vector<1x4x1xf32> to vector<1xf32>
    %171 = vector.shape_cast %170 : vector<1xf32> to vector<1x1x1xf32>
    %172 = vector.extract %171[0, 0, 0] : f32 from vector<1x1x1xf32>
    %cst_100 = arith.constant 4.000000e+00 : f32
    %173 = arith.divf %172, %cst_100 : f32
    %c0_101 = arith.constant 0 : index
    %c0_102 = arith.constant 0 : index
    %174 = memref.load %arg19[%c0_101, %c0_102] : memref<1x1xf32, #tpu.memory_space<smem>>
    memref.store %173, %arg19[%c0_101, %c0_102] : memref<1x1xf32, #tpu.memory_space<smem>>
    return
  }
}

</mosaic_0001>

<llo_original>
// kernel: micro_disease_v3_copy_forward.1
$region0: #{micro_disease_v3_copy_forward.1}
  #allocation0 [shape = 'u32[]', space=smem, size = 0x4, offset = 0x4, fixed_abs, tag = 'smem constant byte address 0x4 - core index']
  #allocation1 [shape = 'u32[144,128]{1,0:T(1,128)}', space=vmem, size = 0x12000, scoped, tag = 'internal scratch']
  #allocation2 [shape = 'f32[24,96]{1,0:T(8,128)}', space=vmem, size = 0x3000, scoped, tag = 'scratch operand']
  #allocation3 [shape = 'f32[24,80]{1,0:T(8,128)}', space=vmem, size = 0x3000, scoped, tag = 'scratch operand']
  %s0 = inlined_call_operand.hbm [shape: f32[6,96], index: 0, kind: input, shape index: {}]
  %s1 = inlined_call_operand.vmem [shape: f32[4,96], index: 1, kind: input, shape index: {}]
  %s2 = inlined_call_operand.hbm [shape: f32[4,96], index: 2, kind: input, shape index: {}]
  %s3 = inlined_call_operand.hbm [shape: f32[5,80], index: 3, kind: input, shape index: {}]
  %s4 = inlined_call_operand.hbm [shape: f32[4,80], index: 4, kind: input, shape index: {}]
  %s5 = inlined_call_operand.hbm [shape: f32[4,80], index: 5, kind: input, shape index: {}]
  %s6 = inlined_call_operand.vmem [shape: bf16[96,512], index: 6, kind: input, shape index: {}]
  %s7 = inlined_call_operand.hbm [shape: bf16[512,256], index: 7, kind: input, shape index: {}]
  %s8 = inlined_call_operand.vmem [shape: bf16[256,64], index: 8, kind: input, shape index: {}]
  %s9 = inlined_call_operand.vmem [shape: bf16[64,64], index: 9, kind: input, shape index: {}]
  %s10 = inlined_call_operand.hbm [shape: f32[1,1024], index: 10, kind: input, shape index: {}]
  %s11 = inlined_call_operand.vmem [shape: bf16[80,512], index: 11, kind: input, shape index: {}]
  %s12 = inlined_call_operand.hbm [shape: bf16[512,256], index: 12, kind: input, shape index: {}]
  %s13 = inlined_call_operand.vmem [shape: bf16[256,64], index: 13, kind: input, shape index: {}]
  %s14 = inlined_call_operand.hbm [shape: bf16[64,64], index: 14, kind: input, shape index: {}]
  %s15 = inlined_call_operand.hbm [shape: f32[1,1024], index: 15, kind: input, shape index: {}]
  %s16 = inlined_call_operand.vmem [shape: f32[24,32], index: 16, kind: input, shape index: {}]
  %s17 = inlined_call_operand.vmem [shape: f32[24,32], index: 17, kind: input, shape index: {}]
  %s18 = inlined_call_operand.hbm [shape: f32[6,5], index: 18, kind: output, shape index: {0}]
  %s19 = inlined_call_operand.hbm [shape: f32[1,1], index: 19, kind: output, shape index: {1}]
  %20 = xla_tuple %s18, %s19
  %s21 = sld [smem:[#allocation0]]
  $region130: #{micro_disease_v3_copy_forward.1} parent=0
    _
  %s23 = ssub.s32 1, %s21
  %s24 = scalar_select 0, %s23, %s21
  $region1: #{micro_disease_v3_copy_forward.1} parent=0
    #allocation4 [shape = 'u8[4096]{0}', space=vmem, size = 0x1000, scoped, tag = 'input window, operand 0, single buffered']
    #allocation5 [shape = 's32[1]{0}', space=sflag, size = 0x4, scoped, tag = 'scoped memory for micro_disease_v3_copy_forward.1']
    #allocation6 [shape = 's32[1]{0}', space=sflag, size = 0x4, scoped, tag = 'scoped memory for micro_disease_v3_copy_forward.1']
    #allocation7 [shape = 's32[1]{0}', space=sflag, size = 0x4, scoped, tag = 'scoped memory for micro_disease_v3_copy_forward.1']
    #allocation8 [shape = 'u8[2048]{0}', space=vmem, size = 0x800, scoped, tag = 'input window, operand 2, single buffered']
    #allocation9 [shape = 's32[1]{0}', space=sflag, size = 0x4, scoped, tag = 'scoped memory for micro_disease_v3_copy_forward.1']
    #allocation10 [shape = 'u8[4096]{0}', space=vmem, size = 0x1000, scoped, tag = 'input window, operand 3, single buffered']
    #allocation11 [shape = 'u8[2048]{0}', space=vmem, size = 0x800, scoped, tag = 'input window, operand 4, single buffered']
    #allocation12 [shape = 's32[1]{0}', space=sflag, size = 0x4, scoped, tag = 'scoped memory for micro_disease_v3_copy_forward.1']
    #allocation13 [shape = 'u8[2048]{0}', space=vmem, size = 0x800, scoped, tag = 'input window, operand 5, single buffered']
    #allocation14 [shape = 'u8[262144]{0}', space=vmem, size = 0x40000, scoped, tag = 'input window, operand 7, single buffered']
    #allocation15 [shape = 's32[1]{0}', space=sflag, size = 0x4, scoped, tag = 'scoped memory for micro_disease_v3_copy_forward.1']
    #allocation16 [shape = 'u8[4096]{0}', space=vmem, size = 0x1000, scoped, tag = 'input window, operand 10, single buffered']
    #allocation17 [shape = 'u8[262144]{0}', space=vmem, size = 0x40000, scoped, tag = 'input window, operand 12, single buffered']
    #allocation18 [shape = 's32[1]{0}', space=sflag, size = 0x4, scoped, tag = 'scoped memory for micro_disease_v3_copy_forward.1']
    #allocation19 [shape = 'u8[16384]{0}', space=vmem, size = 0x4000, scoped, tag = 'input window, operand 14, single buffered']
    #allocation20 [shape = 'u8[4096]{0}', space=vmem, size = 0x1000, scoped, tag = 'input window, operand 15, single buffered']
    #allocation21 [shape = 's32[1]{0}', space=sflag, size = 0x4, scoped, tag = 'scoped memory for micro_disease_v3_copy_forward.1']
    #allocation22 [shape = 'u8[4096]{0}', space=vmem, size = 0x1000, scoped, tag = 'output window, operand 0, single buffered']
    #allocation23 [shape = 'u8[512]{0}', space=smem, size = 0x200, scoped, tag = 'output window, operand 1, single buffered']
    %25 = vsyncpa [#allocation5], 0
    %26 = vsyncpa [#allocation9], 0
    %27 = vsyncpa [#allocation12], 0
    %28 = vsyncpa [#allocation15], 0
    %29 = vsyncpa [#allocation18], 0
    %30 = vsyncpa [#allocation21], 0
    %31 = vsyncpa [#allocation6], 0
    %32 = vsyncpa [#allocation7], 0
    // Predicated region
    $region2: #{micro_disease_v3_copy_forward.1} parent=1 // pred_check
      _
    $region3: #{micro_disease_v3_copy_forward.1} parent=1 // pred_check_branch
      %34 = sbr.rel (0) target = $region5
    $region4: #{micro_disease_v3_copy_forward.1} parent=1 // pred_region
      %s36 = ssub.s32 128, 128
      %37 = vsyncadd [#allocation5], %s36
      %s39 = sshll.u32 [#allocation4], 4
      %s40 = int_to_ptr.vmem [resolvable:$true] %s39
      %42 = dma.hbm_to_vmem [thread:$0]  %s0, 128, %s40, [#allocation5]
    $region5: #{micro_disease_v3_copy_forward.1} parent=1 // pred_fallthru
      _
    // Predicated region
    $region6: #{micro_disease_v3_copy_forward.1} parent=1 // pred_check
      _
    $region7: #{micro_disease_v3_copy_forward.1} parent=1 // pred_check_branch
      %44 = sbr.rel (0) target = $region9
    $region8: #{micro_disease_v3_copy_forward.1} parent=1 // pred_region
      _
    $region9: #{micro_disease_v3_copy_forward.1} parent=1 // pred_fallthru
      _
    // Predicated region
    $region10: #{micro_disease_v3_copy_forward.1} parent=1 // pred_check
      _
    $region11: #{micro_disease_v3_copy_forward.1} parent=1 // pred_check_branch
      %46 = sbr.rel (0) target = $region13
    $region12: #{micro_disease_v3_copy_forward.1} parent=1 // pred_region
      %s48 = ssub.s32 64, 64
      %49 = vsyncadd [#allocation9], %s48
      %s51 = sshll.u32 [#allocation8], 4
      %s52 = int_to_ptr.vmem [resolvable:$true] %s51
      %54 = dma.hbm_to_vmem [thread:$0]  %s2, 64, %s52, [#allocation9]
    $region13: #{micro_disease_v3_copy_forward.1} parent=1 // pred_fallthru
      _
    // Predicated region
    $region14: #{micro_disease_v3_copy_forward.1} parent=1 // pred_check
      _
    $region15: #{micro_disease_v3_copy_forward.1} parent=1 // pred_check_branch
      %56 = sbr.rel (0) target = $region17
    $region16: #{micro_disease_v3_copy_forward.1} parent=1 // pred_region
      %s58 = ssub.s32 128, 128
      %59 = vsyncadd [#allocation9], %s58
      %s61 = sshll.u32 [#allocation10], 4
      %s62 = int_to_ptr.vmem [resolvable:$true] %s61
      %64 = dma.hbm_to_vmem [thread:$0]  %s3, 128, %s62, [#allocation9]
    $region17: #{micro_disease_v3_copy_forward.1} parent=1 // pred_fallthru
      _
    // Predicated region
    $region18: #{micro_disease_v3_copy_forward.1} parent=1 // pred_check
      _
    $region19: #{micro_disease_v3_copy_forward.1} parent=1 // pred_check_branch
      %66 = sbr.rel (0) target = $region21
    $region20: #{micro_disease_v3_copy_forward.1} parent=1 // pred_region
      %s68 = ssub.s32 64, 64
      %69 = vsyncadd [#allocation12], %s68
      %s71 = sshll.u32 [#allocation11], 4
      %s72 = int_to_ptr.vmem [resolvable:$true] %s71
      %74 = dma.hbm_to_vmem [thread:$0]  %s4, 64, %s72, [#allocation12]
    $region21: #{micro_disease_v3_copy_forward.1} parent=1 // pred_fallthru
      _
    // Predicated region
    $region22: #{micro_disease_v3_copy_forward.1} parent=1 // pred_check
      _
    $region23: #{micro_disease_v3_copy_forward.1} parent=1 // pred_check_branch
      %76 = sbr.rel (0) target = $region25
    $region24: #{micro_disease_v3_copy_forward.1} parent=1 // pred_region
      %s78 = ssub.s32 64, 64
      %79 = vsyncadd [#allocation12], %s78
      %s81 = sshll.u32 [#allocation13], 4
      %s82 = int_to_ptr.vmem [resolvable:$true] %s81
      %84 = dma.hbm_to_vmem [thread:$0]  %s5, 64, %s82, [#allocation12]
    $region25: #{micro_disease_v3_copy_forward.1} parent=1 // pred_fallthru
      _
    // Predicated region
    $region26: #{micro_disease_v3_copy_forward.1} parent=1 // pred_check
      _
    $region27: #{micro_disease_v3_copy_forward.1} parent=1 // pred_check_branch
      %86 = sbr.rel (0) target = $region29
    $region28: #{micro_disease_v3_copy_forward.1} parent=1 // pred_region
      _
    $region29: #{micro_disease_v3_copy_forward.1} parent=1 // pred_fallthru
      _
    // Predicated region
    $region30: #{micro_disease_v3_copy_forward.1} parent=1 // pred_check
      _
    $region31: #{micro_disease_v3_copy_forward.1} parent=1 // pred_check_branch
      %88 = sbr.rel (0) target = $region33
    $region32: #{micro_disease_v3_copy_forward.1} parent=1 // pred_region
      %s90 = ssub.s32 8192, 8192
      %91 = vsyncadd [#allocation15], %s90
      %s92 = sshll.u32 [#allocation14], 4
      %s93 = int_to_ptr.vmem [resolvable:$true] %s92
      %98 = dma.hbm_to_vmem [thread:$0]  %s7, 8192, %s93, [#allocation15], 128, 128, 8
    $region33: #{micro_disease_v3_copy_forward.1} parent=1 // pred_fallthru
      _
    // Predicated region
    $region34: #{micro_disease_v3_copy_forward.1} parent=1 // pred_check
      _
    $region35: #{micro_disease_v3_copy_forward.1} parent=1 // pred_check_branch
      %100 = sbr.rel (0) target = $region37
    $region36: #{micro_disease_v3_copy_forward.1} parent=1 // pred_region
      _
    $region37: #{micro_disease_v3_copy_forward.1} parent=1 // pred_fallthru
      _
    // Predicated region
    $region38: #{micro_disease_v3_copy_forward.1} parent=1 // pred_check
      _
    $region39: #{micro_disease_v3_copy_forward.1} parent=1 // pred_check_branch
      %102 = sbr.rel (0) target = $region41
    $region40: #{micro_disease_v3_copy_forward.1} parent=1 // pred_region
      _
    $region41: #{micro_disease_v3_copy_forward.1} parent=1 // pred_fallthru
      _
    // Predicated region
    $region42: #{micro_disease_v3_copy_forward.1} parent=1 // pred_check
      _
    $region43: #{micro_disease_v3_copy_forward.1} parent=1 // pred_check_branch
      %104 = sbr.rel (0) target = $region45
    $region44: #{micro_disease_v3_copy_forward.1} parent=1 // pred_region
      %s106 = ssub.s32 128, 128
      %107 = vsyncadd [#allocation15], %s106
      %s109 = sshll.u32 [#allocation16], 4
      %s110 = int_to_ptr.vmem [resolvable:$true] %s109
      %112 = dma.hbm_to_vmem [thread:$0]  %s10, 128, %s110, [#allocation15]
    $region45: #{micro_disease_v3_copy_forward.1} parent=1 // pred_fallthru
      _
    // Predicated region
    $region46: #{micro_disease_v3_copy_forward.1} parent=1 // pred_check
      _
    $region47: #{micro_disease_v3_copy_forward.1} parent=1 // pred_check_branch
      %114 = sbr.rel (0) target = $region49
    $region48: #{micro_disease_v3_copy_forward.1} parent=1 // pred_region
      _
    $region49: #{micro_disease_v3_copy_forward.1} parent=1 // pred_fallthru
      _
    // Predicated region
    $region50: #{micro_disease_v3_copy_forward.1} parent=1 // pred_check
      _
    $region51: #{micro_disease_v3_copy_forward.1} parent=1 // pred_check_branch
      %116 = sbr.rel (0) target = $region53
    $region52: #{micro_disease_v3_copy_forward.1} parent=1 // pred_region
      %s118 = ssub.s32 8192, 8192
      %119 = vsyncadd [#allocation18], %s118
      %s120 = sshll.u32 [#allocation17], 4
      %s121 = int_to_ptr.vmem [resolvable:$true] %s120
      %126 = dma.hbm_to_vmem [thread:$0]  %s12, 8192, %s121, [#allocation18], 128, 128, 8
    $region53: #{micro_disease_v3_copy_forward.1} parent=1 // pred_fallthru
      _
    // Predicated region
    $region54: #{micro_disease_v3_copy_forward.1} parent=1 // pred_check
      _
    $region55: #{micro_disease_v3_copy_forward.1} parent=1 // pred_check_branch
      %128 = sbr.rel (0) target = $region57
    $region56: #{micro_disease_v3_copy_forward.1} parent=1 // pred_region
      _
    $region57: #{micro_disease_v3_copy_forward.1} parent=1 // pred_fallthru
      _
    // Predicated region
    $region58: #{micro_disease_v3_copy_forward.1} parent=1 // pred_check
      _
    $region59: #{micro_disease_v3_copy_forward.1} parent=1 // pred_check_branch
      %130 = sbr.rel (0) target = $region61
    $region60: #{micro_disease_v3_copy_forward.1} parent=1 // pred_region
      %s132 = ssub.s32 512, 512
      %133 = vsyncadd [#allocation18], %s132
      %s134 = sshll.u32 [#allocation19], 4
      %s135 = int_to_ptr.vmem [resolvable:$true] %s134
      %140 = dma.hbm_to_vmem [thread:$0]  %s14, 512, %s135, [#allocation18], 64, 64, 4
    $region61: #{micro_disease_v3_copy_forward.1} parent=1 // pred_fallthru
      _
    // Predicated region
    $region62: #{micro_disease_v3_copy_forward.1} parent=1 // pred_check
      _
    $region63: #{micro_disease_v3_copy_forward.1} parent=1 // pred_check_branch
      %142 = sbr.rel (0) target = $region65
    $region64: #{micro_disease_v3_copy_forward.1} parent=1 // pred_region
      %s144 = ssub.s32 128, 128
      %145 = vsyncadd [#allocation21], %s144
      %s147 = sshll.u32 [#allocation20], 4
      %s148 = int_to_ptr.vmem [resolvable:$true] %s147
      %150 = dma.hbm_to_vmem [thread:$0]  %s15, 128, %s148, [#allocation21]
    $region65: #{micro_disease_v3_copy_forward.1} parent=1 // pred_fallthru
      _
    // Predicated region
    $region66: #{micro_disease_v3_copy_forward.1} parent=1 // pred_check
      _
    $region67: #{micro_disease_v3_copy_forward.1} parent=1 // pred_check_branch
      %152 = sbr.rel (0) target = $region69
    $region68: #{micro_disease_v3_copy_forward.1} parent=1 // pred_region
      _
    $region69: #{micro_disease_v3_copy_forward.1} parent=1 // pred_fallthru
      _
    // Predicated region
    $region70: #{micro_disease_v3_copy_forward.1} parent=1 // pred_check
      _
    $region71: #{micro_disease_v3_copy_forward.1} parent=1 // pred_check_branch
      %154 = sbr.rel (0) target = $region73
    $region72: #{micro_disease_v3_copy_forward.1} parent=1 // pred_region
      _
    $region73: #{micro_disease_v3_copy_forward.1} parent=1 // pred_fallthru
      _
    // Predicated region
    $region74: #{micro_disease_v3_copy_forward.1} parent=1 // pred_check
      _
    $region75: #{micro_disease_v3_copy_forward.1} parent=1 // pred_check_branch
      %156 = sbr.rel (0) target = $region77
    $region76: #{micro_disease_v3_copy_forward.1} parent=1 // pred_region
      %157 = dma.done [#allocation5], 128
    $region77: #{micro_disease_v3_copy_forward.1} parent=1 // pred_fallthru
      _
    // Predicated region
    $region78: #{micro_disease_v3_copy_forward.1} parent=1 // pred_check
      _
    $region79: #{micro_disease_v3_copy_forward.1} parent=1 // pred_check_branch
      %159 = sbr.rel (0) target = $region81
    $region80: #{micro_disease_v3_copy_forward.1} parent=1 // pred_region
      %160 = dma.done [#allocation9], 64
    $region81: #{micro_disease_v3_copy_forward.1} parent=1 // pred_fallthru
      _
    // Predicated region
    $region82: #{micro_disease_v3_copy_forward.1} parent=1 // pred_check
      _
    $region83: #{micro_disease_v3_copy_forward.1} parent=1 // pred_check_branch
      %162 = sbr.rel (0) target = $region85
    $region84: #{micro_disease_v3_copy_forward.1} parent=1 // pred_region
      %163 = dma.done [#allocation9], 128
    $region85: #{micro_disease_v3_copy_forward.1} parent=1 // pred_fallthru
      _
    // Predicated region
    $region86: #{micro_disease_v3_copy_forward.1} parent=1 // pred_check
      _
    $region87: #{micro_disease_v3_copy_forward.1} parent=1 // pred_check_branch
      %165 = sbr.rel (0) target = $region89
    $region88: #{micro_disease_v3_copy_forward.1} parent=1 // pred_region
      %166 = dma.done [#allocation12], 64
    $region89: #{micro_disease_v3_copy_forward.1} parent=1 // pred_fallthru
      _
    // Predicated region
    $region90: #{micro_disease_v3_copy_forward.1} parent=1 // pred_check
      _
    $region91: #{micro_disease_v3_copy_forward.1} parent=1 // pred_check_branch
      %168 = sbr.rel (0) target = $region93
    $region92: #{micro_disease_v3_copy_forward.1} parent=1 // pred_region
      %169 = dma.done [#allocation12], 64
    $region93: #{micro_disease_v3_copy_forward.1} parent=1 // pred_fallthru
      _
    // Predicated region
    $region94: #{micro_disease_v3_copy_forward.1} parent=1 // pred_check
      _
    $region95: #{micro_disease_v3_copy_forward.1} parent=1 // pred_check_branch
      %171 = sbr.rel (0) target = $region97
    $region96: #{micro_disease_v3_copy_forward.1} parent=1 // pred_region
      %172 = dma.done [#allocation15], 8192
    $region97: #{micro_disease_v3_copy_forward.1} parent=1 // pred_fallthru
      _
    // Predicated region
    $region98: #{micro_disease_v3_copy_forward.1} parent=1 // pred_check
      _
    $region99: #{micro_disease_v3_copy_forward.1} parent=1 // pred_check_branch
      %174 = sbr.rel (0) target = $region101
    $region100: #{micro_disease_v3_copy_forward.1} parent=1 // pred_region
      %175 = dma.done [#allocation15], 128
    $region101: #{micro_disease_v3_copy_forward.1} parent=1 // pred_fallthru
      _
    // Predicated region
    $region102: #{micro_disease_v3_copy_forward.1} parent=1 // pred_check
      _
    $region103: #{micro_disease_v3_copy_forward.1} parent=1 // pred_check_branch
      %177 = sbr.rel (0) target = $region105
    $region104: #{micro_disease_v3_copy_forward.1} parent=1 // pred_region
      %178 = dma.done [#allocation18], 8192
    $region105: #{micro_disease_v3_copy_forward.1} parent=1 // pred_fallthru
      _
    // Predicated region
    $region106: #{micro_disease_v3_copy_forward.1} parent=1 // pred_check
      _
    $region107: #{micro_disease_v3_copy_forward.1} parent=1 // pred_check_branch
      %180 = sbr.rel (0) target = $region109
    $region108: #{micro_disease_v3_copy_forward.1} parent=1 // pred_region
      %181 = dma.done [#allocation18], 512
    $region109: #{micro_disease_v3_copy_forward.1} parent=1 // pred_fallthru
      _
    // Predicated region
    $region110: #{micro_disease_v3_copy_forward.1} parent=1 // pred_check
      _
    $region111: #{micro_disease_v3_copy_forward.1} parent=1 // pred_check_branch
      %183 = sbr.rel (0) target = $region113
    $region112: #{micro_disease_v3_copy_forward.1} parent=1 // pred_region
      %184 = dma.done [#allocation21], 128
    $region113: #{micro_disease_v3_copy_forward.1} parent=1 // pred_fallthru
      _
    %vm186 = vcmask 785408
    %187 = vst.msk [vmem:[#allocation2] sm:$0xff] %vm186, 0.0
    %188 = vst.msk [vmem:[#allocation2 + $0x8] sm:$0xff] %vm186, 0.0
    %189 = vst.msk [vmem:[#allocation2 + $0x10] sm:$0xff] %vm186, 0.0
    %v190 = vld [vmem:[#allocation4] sm:$0x3f]
    %vm191 = vcmask 783360
    %192 = vst.msk [vmem:[#allocation2] sm:$0x3f] %vm191, %v190
    %v193 = vld [vmem:[%s1] sm:$0xf]
    %vm194 = vcmask 781312
    %195 = vst.msk [vmem:[#allocation2 + $0x8] sm:$0xf] %vm194, %v193
    %v196 = vld [vmem:[#allocation8] sm:$0xf]
    %197 = vst.msk [vmem:[#allocation2 + $0x10] sm:$0xf] %vm194, %v196
    %vm198 = vcmask 654336
    %199 = vst.msk [vmem:[#allocation3] sm:$0xff] %vm198, 0.0
    %200 = vst.msk [vmem:[#allocation3 + $0x8] sm:$0xff] %vm198, 0.0
    %201 = vst.msk [vmem:[#allocation3 + $0x10] sm:$0xff] %vm198, 0.0
    %v202 = vld [vmem:[#allocation10] sm:$0x1f]
    %vm203 = vcmask 651264
    %204 = vst.msk [vmem:[#allocation3] sm:$0x1f] %vm203, %v202
    %v205 = vld [vmem:[#allocation11] sm:$0xf]
    %vm206 = vcmask 650240
    %207 = vst.msk [vmem:[#allocation3 + $0x8] sm:$0xf] %vm206, %v205
    %v208 = vld [vmem:[#allocation13] sm:$0xf]
    %209 = vst.msk [vmem:[#allocation3 + $0x10] sm:$0xf] %vm206, %v208
    %v210 = vld [vmem:[#allocation2] sm:$0xff]
    %v211 = vld [vmem:[#allocation2 + $0x8] sm:$0xff]
    %v212 = vld [vmem:[#allocation2 + $0x10] sm:$0xff]
    %v213 = vld [vmem:[%s16] sm:$0xff]
    %v214 = vld [vmem:[%s16 + $0x8] sm:$0xff]
    %v215 = vld [vmem:[%s16 + $0x10] sm:$0xff]
    %v216 = vld [vmem:[#allocation16] sm:$0xf]
    %v217 = vld [vmem:[#allocation16 + $0x4] sm:$0x3]
    %v218 = vld [vmem:[#allocation16 + $0x6] sm:$0x1]
    %v219 = vld [vmem:[#allocation16 + $0x7] sm:$0x1]
    %v220 = vpack.c.bf16 %v211, %v210
    %v221 = vpack.c.bf16 %v212, %v212
    %v222 = vld [vmem:[%s6] sm:$0xff]
    %v223 = vld [vmem:[%s6 + $0x8] sm:$0xff]
    %v224 = vld [vmem:[%s6 + $0x10] sm:$0xff]
    %v225 = vld [vmem:[%s6 + $0x18] sm:$0xff]
    %v226 = vld [vmem:[%s6 + $0x20] sm:$0xff]
    %v227 = vld [vmem:[%s6 + $0x28] sm:$0xff]
    %v228 = vld [vmem:[%s6 + $0x30] sm:$0xff]
    %v229 = vld [vmem:[%s6 + $0x38] sm:$0xff]
    %v230 = vld [vmem:[%s6 + $0x40] sm:$0xff]
    %v231 = vld [vmem:[%s6 + $0x48] sm:$0xff]
    %v232 = vld [vmem:[%s6 + $0x50] sm:$0xff]
    %v233 = vld [vmem:[%s6 + $0x58] sm:$0xff]
    %v234 = vld [vmem:[%s6 + $0x60] sm:$0xff]
    %v235 = vld [vmem:[%s6 + $0x68] sm:$0xff]
    %v236 = vld [vmem:[%s6 + $0x70] sm:$0xff]
    %v237 = vld [vmem:[%s6 + $0x78] sm:$0xff]
    %v238 = vld [vmem:[%s6 + $0x80] sm:$0xff]
    %v239 = vld [vmem:[%s6 + $0x88] sm:$0xff]
    %v240 = vld [vmem:[%s6 + $0x90] sm:$0xff]
    %v241 = vld [vmem:[%s6 + $0x98] sm:$0xff]
    %v242 = vld [vmem:[%s6 + $0xa0] sm:$0xff]
    %v243 = vld [vmem:[%s6 + $0xa8] sm:$0xff]
    %v244 = vld [vmem:[%s6 + $0xb0] sm:$0xff]
    %v245 = vld [vmem:[%s6 + $0xb8] sm:$0xff]
    %v247 = vlaneseq
    %v248 = vshrl.u32 %v247, 7
    %v249 = vsub.s32 0, %v248
    %v250 = vrot.slane %v216, %v249
    %v251 = vlaneseq
    %v252 = vshrl.u32 %v251, 7
    %v253 = vsub.s32 1, %v252
    %v254 = vrot.slane %v216, %v253
    %v255 = vlaneseq
    %v256 = vshrl.u32 %v255, 7
    %v257 = vsub.s32 2, %v256
    %v258 = vrot.slane %v216, %v257
    %v259 = vlaneseq
    %v260 = vshrl.u32 %v259, 7
    %v261 = vsub.s32 3, %v260
    %v262 = vrot.slane %v216, %v261
    %v291 = vunpack.c.l.b16 %v222
    %v292 = vunpack.c.h.b16 %v222
    %v293 = vunpack.c.l.b16 %v223
    %v294 = vunpack.c.h.b16 %v223
    %v295 = vunpack.c.l.b16 %v224
    %v296 = vunpack.c.h.b16 %v224
    %v297 = vunpack.c.l.b16 %v225
    %v298 = vunpack.c.h.b16 %v225
    %v299 = vunpack.c.l.b16 %v226
    %v300 = vunpack.c.h.b16 %v226
    %v301 = vunpack.c.l.b16 %v227
    %v302 = vunpack.c.h.b16 %v227
    %v303 = vunpack.c.l.b16 %v228
    %v304 = vunpack.c.h.b16 %v228
    %v305 = vunpack.c.l.b16 %v229
    %v306 = vunpack.c.h.b16 %v229
    %v307 = vunpack.c.l.b16 %v230
    %v308 = vunpack.c.h.b16 %v230
    %v309 = vunpack.c.l.b16 %v231
    %v310 = vunpack.c.h.b16 %v231
    %v311 = vunpack.c.l.b16 %v232
    %v312 = vunpack.c.h.b16 %v232
    %v313 = vunpack.c.l.b16 %v233
    %v314 = vunpack.c.h.b16 %v233
    %v315 = vunpack.c.l.b16 %v234
    %v316 = vunpack.c.h.b16 %v234
    %v317 = vunpack.c.l.b16 %v235
    %v318 = vunpack.c.h.b16 %v235
    %v319 = vunpack.c.l.b16 %v236
    %v320 = vunpack.c.h.b16 %v236
    %v321 = vunpack.c.l.b16 %v237
    %v322 = vunpack.c.h.b16 %v237
    %v323 = vunpack.c.l.b16 %v238
    %v324 = vunpack.c.h.b16 %v238
    %v325 = vunpack.c.l.b16 %v239
    %v326 = vunpack.c.h.b16 %v239
    %v327 = vunpack.c.l.b16 %v240
    %v328 = vunpack.c.h.b16 %v240
    %v329 = vunpack.c.l.b16 %v241
    %v330 = vunpack.c.h.b16 %v241
    %v331 = vunpack.c.l.b16 %v242
    %v332 = vunpack.c.h.b16 %v242
    %v333 = vunpack.c.l.b16 %v243
    %v334 = vunpack.c.h.b16 %v243
    %v335 = vunpack.c.l.b16 %v244
    %v336 = vunpack.c.h.b16 %v244
    %v337 = vunpack.c.l.b16 %v245
    %v338 = vunpack.c.h.b16 %v245
    %v339 = vpack.c.b16 %v295, %v291
    %v340 = vpack.c.b16 %v296, %v292
    %v341 = vpack.c.b16 %v297, %v293
    %v342 = vpack.c.b16 %v298, %v294
    %v343 = vpack.c.b16 %v303, %v299
    %v344 = vpack.c.b16 %v304, %v300
    %v345 = vpack.c.b16 %v305, %v301
    %v346 = vpack.c.b16 %v306, %v302
    %v347 = vpack.c.b16 %v311, %v307
    %v348 = vpack.c.b16 %v312, %v308
    %v349 = vpack.c.b16 %v313, %v309
    %v350 = vpack.c.b16 %v314, %v310
    %v351 = vpack.c.b16 %v319, %v315
    %v352 = vpack.c.b16 %v320, %v316
    %v353 = vpack.c.b16 %v321, %v317
    %v354 = vpack.c.b16 %v322, %v318
    %v355 = vpack.c.b16 %v327, %v323
    %v356 = vpack.c.b16 %v328, %v324
    %v357 = vpack.c.b16 %v329, %v325
    %v358 = vpack.c.b16 %v330, %v326
    %v359 = vpack.c.b16 %v335, %v331
    %v360 = vpack.c.b16 %v336, %v332
    %v361 = vpack.c.b16 %v337, %v333
    %v362 = vpack.c.b16 %v338, %v334
    %v388 = vsel %vm186, %v220, 0
    %v391 = vsel %vm186, %v221, 0
    %393 = vmatprep.subr.bf16.mxu0 %v340
    %394 = vmatpush1.bf16.msra.mxu0 %v339
    %395 = vmatprep.subr.bf16.mxu0 %v344
    %396 = vmatpush1.bf16.msra.mxu0 %v343
    %397 = vmatprep.subr.bf16.mxu0 %v348
    %398 = vmatpush1.bf16.msra.mxu0 %v347
    %399 = vmatprep.subr.bf16.mxu0 %v352
    %400 = vmatpush1.bf16.msra.mxu0 %v351
    %401 = vmatprep.subr.bf16.mxu0 %v356
    %402 = vmatpush1.bf16.msra.mxu0 %v355
    %403 = vmatprep.subr.bf16.mxu0 %v360
    %404 = vmatpush1.bf16.msra.mxu0 %v359
    %405 = vmatprep.subr.bf16.mxu0 0
    %406 = vmatpush1.bf16.msra.mxu0 0
    %407 = vmatprep.subr.bf16.mxu0 0
    %408 = vmatpush1.bf16.msra.mxu0 0
    %409 = vmatprep.subr.bf16.mxu0 0
    %410 = vmatpush1.bf16.msra.mxu0 0
    %411 = vmatprep.subr.bf16.mxu0 0
    %412 = vmatpush1.bf16.msra.mxu0 0
    %413 = vmatprep.subr.bf16.mxu0 0
    %414 = vmatpush1.bf16.msra.mxu0 0
    %415 = vmatprep.subr.bf16.mxu0 0
    %416 = vmatpush1.bf16.msra.mxu0 0
    %417 = vmatprep.subr.bf16.mxu0 0
    %418 = vmatpush1.bf16.msra.mxu0 0
    %419 = vmatprep.subr.bf16.mxu0 0
    %420 = vmatpush1.bf16.msra.mxu0 0
    %421 = vmatprep.subr.bf16.mxu0 0
    %422 = vmatpush1.bf16.msra.mxu0 0
    %423 = vmatprep.subr.bf16.mxu0 0
    %424 = vmatpush1.bf16.msra.mxu0 0
    %425 = vmatprep.mubr.bf16.mxu0 0
    %426 = vmatmul.mubr.bf16.gmra.mrb[0].mxu0 %v388
    %v427 = vpop.f32.mrb[0].mxu0
    %v428 = vadd.f32 %v250, %v427
    %v429 = vpop.f32.mrb[0].mxu0
    %v430 = vadd.f32 %v254, %v429
    %v431 = vpop.f32.mrb[0].mxu0
    %v432 = vadd.f32 %v250, %v431
    %v433 = vpop.f32.mrb[0].mxu0
    %v434 = vadd.f32 %v254, %v433
    %435 = vmatprep.mubr.bf16.mxu0 0
    %436 = vmatmul.mubr.bf16.gmra.mrb[0].mxu0 %v391
    %v437 = vpop.f32.mrb[0].mxu0
    %v438 = vadd.f32 %v250, %v437
    %v439 = vpop.f32.mrb[0].mxu0
    %v440 = vadd.f32 %v254, %v439
    %v441 = vpop.f32.mrb[0].mxu0
    %v442 = vpop.f32.mrb[0].mxu0
    %443 = vdwg.mxu0
    %444 = vmatprep.subr.bf16.mxu0 %v342
    %445 = vmatpush1.bf16.msra.mxu0 %v341
    %446 = vmatprep.subr.bf16.mxu0 %v346
    %447 = vmatpush1.bf16.msra.mxu0 %v345
    %448 = vmatprep.subr.bf16.mxu0 %v350
    %449 = vmatpush1.bf16.msra.mxu0 %v349
    %450 = vmatprep.subr.bf16.mxu0 %v354
    %451 = vmatpush1.bf16.msra.mxu0 %v353
    %452 = vmatprep.subr.bf16.mxu0 %v358
    %453 = vmatpush1.bf16.msra.mxu0 %v357
    %454 = vmatprep.subr.bf16.mxu0 %v362
    %455 = vmatpush1.bf16.msra.mxu0 %v361
    %456 = vmatprep.subr.bf16.mxu0 0
    %457 = vmatpush1.bf16.msra.mxu0 0
    %458 = vmatprep.subr.bf16.mxu0 0
    %459 = vmatpush1.bf16.msra.mxu0 0
    %460 = vmatprep.subr.bf16.mxu0 0
    %461 = vmatpush1.bf16.msra.mxu0 0
    %462 = vmatprep.subr.bf16.mxu0 0
    %463 = vmatpush1.bf16.msra.mxu0 0
    %464 = vmatprep.subr.bf16.mxu0 0
    %465 = vmatpush1.bf16.msra.mxu0 0
    %466 = vmatprep.subr.bf16.mxu0 0
    %467 = vmatpush1.bf16.msra.mxu0 0
    %468 = vmatprep.subr.bf16.mxu0 0
    %469 = vmatpush1.bf16.msra.mxu0 0
    %470 = vmatprep.subr.bf16.mxu0 0
    %471 = vmatpush1.bf16.msra.mxu0 0
    %472 = vmatprep.subr.bf16.mxu0 0
    %473 = vmatpush1.bf16.msra.mxu0 0
    %474 = vmatprep.subr.bf16.mxu0 0
    %475 = vmatpush1.bf16.msra.mxu0 0
    %476 = vmatprep.mubr.bf16.mxu0 0
    %477 = vmatmul.mubr.bf16.gmra.mrb[0].mxu0 %v388
    %v478 = vpop.f32.mrb[0].mxu0
    %v479 = vadd.f32 %v258, %v478
    %v480 = vpop.f32.mrb[0].mxu0
    %v481 = vadd.f32 %v262, %v480
    %v482 = vpop.f32.mrb[0].mxu0
    %v483 = vadd.f32 %v258, %v482
    %v484 = vpop.f32.mrb[0].mxu0
    %v485 = vadd.f32 %v262, %v484
    %486 = vmatprep.mubr.bf16.mxu0 0
    %487 = vmatmul.mubr.bf16.gmra.mrb[0].mxu0 %v391
    %v488 = vpop.f32.mrb[0].mxu0
    %v489 = vadd.f32 %v258, %v488
    %v490 = vpop.f32.mrb[0].mxu0
    %v491 = vadd.f32 %v262, %v490
    %v492 = vpop.f32.mrb[0].mxu0
    %v493 = vpop.f32.mrb[0].mxu0
    %494 = vdwg.mxu0
    %v495 = vmax.f32 %v428, 0.0
    %v496 = vmax.f32 %v430, 0.0
    %v497 = vmax.f32 %v479, 0.0
    %v498 = vmax.f32 %v481, 0.0
    %v499 = vmax.f32 %v432, 0.0
    %v500 = vmax.f32 %v434, 0.0
    %v501 = vmax.f32 %v483, 0.0
    %v502 = vmax.f32 %v485, 0.0
    %v503 = vmax.f32 %v438, 0.0
    %v504 = vmax.f32 %v440, 0.0
    %v505 = vmax.f32 %v489, 0.0
    %v506 = vmax.f32 %v491, 0.0
    %v507 = vpack.c.bf16 %v499, %v495
    %v508 = vpack.c.bf16 %v500, %v496
    %v509 = vpack.c.bf16 %v501, %v497
    %v510 = vpack.c.bf16 %v502, %v498
    %v511 = vpack.c.bf16 %v503, %v503
    %v512 = vpack.c.bf16 %v504, %v504
    %v513 = vpack.c.bf16 %v505, %v505
    %v514 = vpack.c.bf16 %v506, %v506
    %v515 = vld [vmem:[#allocation14] sm:$0xff]
    %v516 = vld [vmem:[#allocation14 + $0x8] sm:$0xff]
    %v517 = vld [vmem:[#allocation14 + $0x10] sm:$0xff]
    %v518 = vld [vmem:[#allocation14 + $0x18] sm:$0xff]
    %v519 = vld [vmem:[#allocation14 + $0x20] sm:$0xff]
    %v520 = vld [vmem:[#allocation14 + $0x28] sm:$0xff]
    %v521 = vld [vmem:[#allocation14 + $0x30] sm:$0xff]
    %v522 = vld [vmem:[#allocation14 + $0x38] sm:$0xff]
    %v523 = vld [vmem:[#allocation14 + $0x40] sm:$0xff]
    %v524 = vld [vmem:[#allocation14 + $0x48] sm:$0xff]
    %v525 = vld [vmem:[#allocation14 + $0x50] sm:$0xff]
    %v526 = vld [vmem:[#allocation14 + $0x58] sm:$0xff]
    %v527 = vld [vmem:[#allocation14 + $0x60] sm:$0xff]
    %v528 = vld [vmem:[#allocation14 + $0x68] sm:$0xff]
    %v529 = vld [vmem:[#allocation14 + $0x70] sm:$0xff]
    %v530 = vld [vmem:[#allocation14 + $0x78] sm:$0xff]
    %v531 = vld [vmem:[#allocation14 + $0x80] sm:$0xff]
    %v532 = vld [vmem:[#allocation14 + $0x88] sm:$0xff]
    %v533 = vld [vmem:[#allocation14 + $0x90] sm:$0xff]
    %v534 = vld [vmem:[#allocation14 + $0x98] sm:$0xff]
    %v535 = vld [vmem:[#allocation14 + $0xa0] sm:$0xff]
    %v536 = vld [vmem:[#allocation14 + $0xa8] sm:$0xff]
    %v537 = vld [vmem:[#allocation14 + $0xb0] sm:$0xff]
    %v538 = vld [vmem:[#allocation14 + $0xb8] sm:$0xff]
    %v539 = vld [vmem:[#allocation14 + $0xc0] sm:$0xff]
    %v540 = vld [vmem:[#allocation14 + $0xc8] sm:$0xff]
    %v541 = vld [vmem:[#allocation14 + $0xd0] sm:$0xff]
    %v542 = vld [vmem:[#allocation14 + $0xd8] sm:$0xff]
    %v543 = vld [vmem:[#allocation14 + $0xe0] sm:$0xff]
    %v544 = vld [vmem:[#allocation14 + $0xe8] sm:$0xff]
    %v545 = vld [vmem:[#allocation14 + $0xf0] sm:$0xff]
    %v546 = vld [vmem:[#allocation14 + $0xf8] sm:$0xff]
    %v547 = vld [vmem:[#allocation14 + $0x100] sm:$0xff]
    %v548 = vld [vmem:[#allocation14 + $0x108] sm:$0xff]
    %v549 = vld [vmem:[#allocation14 + $0x110] sm:$0xff]
    %v550 = vld [vmem:[#allocation14 + $0x118] sm:$0xff]
    %v551 = vld [vmem:[#allocation14 + $0x120] sm:$0xff]
    %v552 = vld [vmem:[#allocation14 + $0x128] sm:$0xff]
    %v553 = vld [vmem:[#allocation14 + $0x130] sm:$0xff]
    %v554 = vld [vmem:[#allocation14 + $0x138] sm:$0xff]
    %v555 = vld [vmem:[#allocation14 + $0x140] sm:$0xff]
    %v556 = vld [vmem:[#allocation14 + $0x148] sm:$0xff]
    %v557 = vld [vmem:[#allocation14 + $0x150] sm:$0xff]
    %v558 = vld [vmem:[#allocation14 + $0x158] sm:$0xff]
    %v559 = vld [vmem:[#allocation14 + $0x160] sm:$0xff]
    %v560 = vld [vmem:[#allocation14 + $0x168] sm:$0xff]
    %v561 = vld [vmem:[#allocation14 + $0x170] sm:$0xff]
    %v562 = vld [vmem:[#allocation14 + $0x178] sm:$0xff]
    %v563 = vld [vmem:[#allocation14 + $0x180] sm:$0xff]
    %v564 = vld [vmem:[#allocation14 + $0x188] sm:$0xff]
    %v565 = vld [vmem:[#allocation14 + $0x190] sm:$0xff]
    %v566 = vld [vmem:[#allocation14 + $0x198] sm:$0xff]
    %v567 = vld [vmem:[#allocation14 + $0x1a0] sm:$0xff]
    %v568 = vld [vmem:[#allocation14 + $0x1a8] sm:$0xff]
    %v569 = vld [vmem:[#allocation14 + $0x1b0] sm:$0xff]
    %v570 = vld [vmem:[#allocation14 + $0x1b8] sm:$0xff]
    %v571 = vld [vmem:[#allocation14 + $0x1c0] sm:$0xff]
    %v572 = vld [vmem:[#allocation14 + $0x1c8] sm:$0xff]
    %v573 = vld [vmem:[#allocation14 + $0x1d0] sm:$0xff]
    %v574 = vld [vmem:[#allocation14 + $0x1d8] sm:$0xff]
    %v575 = vld [vmem:[#allocation14 + $0x1e0] sm:$0xff]
    %v576 = vld [vmem:[#allocation14 + $0x1e8] sm:$0xff]
    %v577 = vld [vmem:[#allocation14 + $0x1f0] sm:$0xff]
    %v578 = vld [vmem:[#allocation14 + $0x1f8] sm:$0xff]
    %v580 = vlaneseq
    %v581 = vshrl.u32 %v580, 7
    %v582 = vsub.s32 0, %v581
    %v583 = vrot.slane %v217, %v582
    %v584 = vlaneseq
    %v585 = vshrl.u32 %v584, 7
    %v586 = vsub.s32 1, %v585
    %v587 = vrot.slane %v217, %v586
    %v654 = vunpack.c.l.b16 %v515
    %v655 = vunpack.c.h.b16 %v515
    %v656 = vunpack.c.l.b16 %v516
    %v657 = vunpack.c.h.b16 %v516
    %v658 = vunpack.c.l.b16 %v517
    %v659 = vunpack.c.h.b16 %v517
    %v660 = vunpack.c.l.b16 %v518
    %v661 = vunpack.c.h.b16 %v518
    %v662 = vunpack.c.l.b16 %v519
    %v663 = vunpack.c.h.b16 %v519
    %v664 = vunpack.c.l.b16 %v520
    %v665 = vunpack.c.h.b16 %v520
    %v666 = vunpack.c.l.b16 %v521
    %v667 = vunpack.c.h.b16 %v521
    %v668 = vunpack.c.l.b16 %v522
    %v669 = vunpack.c.h.b16 %v522
    %v670 = vunpack.c.l.b16 %v523
    %v671 = vunpack.c.h.b16 %v523
    %v672 = vunpack.c.l.b16 %v524
    %v673 = vunpack.c.h.b16 %v524
    %v674 = vunpack.c.l.b16 %v525
    %v675 = vunpack.c.h.b16 %v525
    %v676 = vunpack.c.l.b16 %v526
    %v677 = vunpack.c.h.b16 %v526
    %v678 = vunpack.c.l.b16 %v527
    %v679 = vunpack.c.h.b16 %v527
    %v680 = vunpack.c.l.b16 %v528
    %v681 = vunpack.c.h.b16 %v528
    %v682 = vunpack.c.l.b16 %v529
    %v683 = vunpack.c.h.b16 %v529
    %v684 = vunpack.c.l.b16 %v530
    %v685 = vunpack.c.h.b16 %v530
    %v686 = vunpack.c.l.b16 %v531
    %v687 = vunpack.c.h.b16 %v531
    %v688 = vunpack.c.l.b16 %v532
    %v689 = vunpack.c.h.b16 %v532
    %v690 = vunpack.c.l.b16 %v533
    %v691 = vunpack.c.h.b16 %v533
    %v692 = vunpack.c.l.b16 %v534
    %v693 = vunpack.c.h.b16 %v534
    %v694 = vunpack.c.l.b16 %v535
    %v695 = vunpack.c.h.b16 %v535
    %v696 = vunpack.c.l.b16 %v536
    %v697 = vunpack.c.h.b16 %v536
    %v698 = vunpack.c.l.b16 %v537
    %v699 = vunpack.c.h.b16 %v537
    %v700 = vunpack.c.l.b16 %v538
    %v701 = vunpack.c.h.b16 %v538
    %v702 = vunpack.c.l.b16 %v539
    %v703 = vunpack.c.h.b16 %v539
    %v704 = vunpack.c.l.b16 %v540
    %v705 = vunpack.c.h.b16 %v540
    %v706 = vunpack.c.l.b16 %v541
    %v707 = vunpack.c.h.b16 %v541
    %v708 = vunpack.c.l.b16 %v542
    %v709 = vunpack.c.h.b16 %v542
    %v710 = vunpack.c.l.b16 %v543
    %v711 = vunpack.c.h.b16 %v543
    %v712 = vunpack.c.l.b16 %v544
    %v713 = vunpack.c.h.b16 %v544
    %v714 = vunpack.c.l.b16 %v545
    %v715 = vunpack.c.h.b16 %v545
    %v716 = vunpack.c.l.b16 %v546
    %v717 = vunpack.c.h.b16 %v546
    %v718 = vunpack.c.l.b16 %v547
    %v719 = vunpack.c.h.b16 %v547
    %v720 = vunpack.c.l.b16 %v548
    %v721 = vunpack.c.h.b16 %v548
    %v722 = vunpack.c.l.b16 %v549
    %v723 = vunpack.c.h.b16 %v549
    %v724 = vunpack.c.l.b16 %v550
    %v725 = vunpack.c.h.b16 %v550
    %v726 = vunpack.c.l.b16 %v551
    %v727 = vunpack.c.h.b16 %v551
    %v728 = vunpack.c.l.b16 %v552
    %v729 = vunpack.c.h.b16 %v552
    %v730 = vunpack.c.l.b16 %v553
    %v731 = vunpack.c.h.b16 %v553
    %v732 = vunpack.c.l.b16 %v554
    %v733 = vunpack.c.h.b16 %v554
    %v734 = vunpack.c.l.b16 %v555
    %v735 = vunpack.c.h.b16 %v555
    %v736 = vunpack.c.l.b16 %v556
    %v737 = vunpack.c.h.b16 %v556
    %v738 = vunpack.c.l.b16 %v557
    %v739 = vunpack.c.h.b16 %v557
    %v740 = vunpack.c.l.b16 %v558
    %v741 = vunpack.c.h.b16 %v558
    %v742 = vunpack.c.l.b16 %v559
    %v743 = vunpack.c.h.b16 %v559
    %v744 = vunpack.c.l.b16 %v560
    %v745 = vunpack.c.h.b16 %v560
    %v746 = vunpack.c.l.b16 %v561
    %v747 = vunpack.c.h.b16 %v561
    %v748 = vunpack.c.l.b16 %v562
    %v749 = vunpack.c.h.b16 %v562
    %v750 = vunpack.c.l.b16 %v563
    %v751 = vunpack.c.h.b16 %v563
    %v752 = vunpack.c.l.b16 %v564
    %v753 = vunpack.c.h.b16 %v564
    %v754 = vunpack.c.l.b16 %v565
    %v755 = vunpack.c.h.b16 %v565
    %v756 = vunpack.c.l.b16 %v566
    %v757 = vunpack.c.h.b16 %v566
    %v758 = vunpack.c.l.b16 %v567
    %v759 = vunpack.c.h.b16 %v567
    %v760 = vunpack.c.l.b16 %v568
    %v761 = vunpack.c.h.b16 %v568
    %v762 = vunpack.c.l.b16 %v569
    %v763 = vunpack.c.h.b16 %v569
    %v764 = vunpack.c.l.b16 %v570
    %v765 = vunpack.c.h.b16 %v570
    %v766 = vunpack.c.l.b16 %v571
    %v767 = vunpack.c.h.b16 %v571
    %v768 = vunpack.c.l.b16 %v572
    %v769 = vunpack.c.h.b16 %v572
    %v770 = vunpack.c.l.b16 %v573
    %v771 = vunpack.c.h.b16 %v573
    %v772 = vunpack.c.l.b16 %v574
    %v773 = vunpack.c.h.b16 %v574
    %v774 = vunpack.c.l.b16 %v575
    %v775 = vunpack.c.h.b16 %v575
    %v776 = vunpack.c.l.b16 %v576
    %v777 = vunpack.c.h.b16 %v576
    %v778 = vunpack.c.l.b16 %v577
    %v779 = vunpack.c.h.b16 %v577
    %v780 = vunpack.c.l.b16 %v578
    %v781 = vunpack.c.h.b16 %v578
    %v782 = vpack.c.b16 %v656, %v654
    %v783 = vpack.c.b16 %v657, %v655
    %v784 = vpack.c.b16 %v660, %v658
    %v785 = vpack.c.b16 %v661, %v659
    %v786 = vpack.c.b16 %v664, %v662
    %v787 = vpack.c.b16 %v665, %v663
    %v788 = vpack.c.b16 %v668, %v666
    %v789 = vpack.c.b16 %v669, %v667
    %v790 = vpack.c.b16 %v672, %v670
    %v791 = vpack.c.b16 %v673, %v671
    %v792 = vpack.c.b16 %v676, %v674
    %v793 = vpack.c.b16 %v677, %v675
    %v794 = vpack.c.b16 %v680, %v678
    %v795 = vpack.c.b16 %v681, %v679
    %v796 = vpack.c.b16 %v684, %v682
    %v797 = vpack.c.b16 %v685, %v683
    %v798 = vpack.c.b16 %v688, %v686
    %v799 = vpack.c.b16 %v689, %v687
    %v800 = vpack.c.b16 %v692, %v690
    %v801 = vpack.c.b16 %v693, %v691
    %v802 = vpack.c.b16 %v696, %v694
    %v803 = vpack.c.b16 %v697, %v695
    %v804 = vpack.c.b16 %v700, %v698
    %v805 = vpack.c.b16 %v701, %v699
    %v806 = vpack.c.b16 %v704, %v702
    %v807 = vpack.c.b16 %v705, %v703
    %v808 = vpack.c.b16 %v708, %v706
    %v809 = vpack.c.b16 %v709, %v707
    %v810 = vpack.c.b16 %v712, %v710
    %v811 = vpack.c.b16 %v713, %v711
    %v812 = vpack.c.b16 %v716, %v714
    %v813 = vpack.c.b16 %v717, %v715
    %v814 = vpack.c.b16 %v720, %v718
    %v815 = vpack.c.b16 %v721, %v719
    %v816 = vpack.c.b16 %v724, %v722
    %v817 = vpack.c.b16 %v725, %v723
    %v818 = vpack.c.b16 %v728, %v726
    %v819 = vpack.c.b16 %v729, %v727
    %v820 = vpack.c.b16 %v732, %v730
    %v821 = vpack.c.b16 %v733, %v731
    %v822 = vpack.c.b16 %v736, %v734
    %v823 = vpack.c.b16 %v737, %v735
    %v824 = vpack.c.b16 %v740, %v738
    %v825 = vpack.c.b16 %v741, %v739
    %v826 = vpack.c.b16 %v744, %v742
    %v827 = vpack.c.b16 %v745, %v743
    %v828 = vpack.c.b16 %v748, %v746
    %v829 = vpack.c.b16 %v749, %v747
    %v830 = vpack.c.b16 %v752, %v750
    %v831 = vpack.c.b16 %v753, %v751
    %v832 = vpack.c.b16 %v756, %v754
    %v833 = vpack.c.b16 %v757, %v755
    %v834 = vpack.c.b16 %v760, %v758
    %v835 = vpack.c.b16 %v761, %v759
    %v836 = vpack.c.b16 %v764, %v762
    %v837 = vpack.c.b16 %v765, %v763
    %v838 = vpack.c.b16 %v768, %v766
    %v839 = vpack.c.b16 %v769, %v767
    %v840 = vpack.c.b16 %v772, %v770
    %v841 = vpack.c.b16 %v773, %v771
    %v842 = vpack.c.b16 %v776, %v774
    %v843 = vpack.c.b16 %v777, %v775
    %v844 = vpack.c.b16 %v780, %v778
    %v845 = vpack.c.b16 %v781, %v779
    %910 = vmatprep.subr.bf16.mxu0 %v783
    %911 = vmatpush1.bf16.msra.mxu0 %v782
    %912 = vmatprep.subr.bf16.mxu0 %v785
    %913 = vmatpush1.bf16.msra.mxu0 %v784
    %914 = vmatprep.subr.bf16.mxu0 %v787
    %915 = vmatpush1.bf16.msra.mxu0 %v786
    %916 = vmatprep.subr.bf16.mxu0 %v789
    %917 = vmatpush1.bf16.msra.mxu0 %v788
    %918 = vmatprep.subr.bf16.mxu0 %v791
    %919 = vmatpush1.bf16.msra.mxu0 %v790
    %920 = vmatprep.subr.bf16.mxu0 %v793
    %921 = vmatpush1.bf16.msra.mxu0 %v792
    %922 = vmatprep.subr.bf16.mxu0 %v795
    %923 = vmatpush1.bf16.msra.mxu0 %v794
    %924 = vmatprep.subr.bf16.mxu0 %v797
    %925 = vmatpush1.bf16.msra.mxu0 %v796
    %926 = vmatprep.subr.bf16.mxu0 %v799
    %927 = vmatpush1.bf16.msra.mxu0 %v798
    %928 = vmatprep.subr.bf16.mxu0 %v801
    %929 = vmatpush1.bf16.msra.mxu0 %v800
    %930 = vmatprep.subr.bf16.mxu0 %v803
    %931 = vmatpush1.bf16.msra.mxu0 %v802
    %932 = vmatprep.subr.bf16.mxu0 %v805
    %933 = vmatpush1.bf16.msra.mxu0 %v804
    %934 = vmatprep.subr.bf16.mxu0 %v807
    %935 = vmatpush1.bf16.msra.mxu0 %v806
    %936 = vmatprep.subr.bf16.mxu0 %v809
    %937 = vmatpush1.bf16.msra.mxu0 %v808
    %938 = vmatprep.subr.bf16.mxu0 %v811
    %939 = vmatpush1.bf16.msra.mxu0 %v810
    %940 = vmatprep.subr.bf16.mxu0 %v813
    %941 = vmatpush1.bf16.msra.mxu0 %v812
    %942 = vmatprep.mubr.bf16.mxu0 %v508
    %943 = vmatmul.mubr.bf16.gmra.mrb[0].mxu0 %v507
    %v944 = vpop.f32.mrb[0].mxu0
    %v945 = vadd.f32 %v583, %v944
    %v946 = vpop.f32.mrb[0].mxu0
    %v947 = vadd.f32 %v587, %v946
    %v948 = vpop.f32.mrb[0].mxu0
    %v949 = vadd.f32 %v583, %v948
    %v950 = vpop.f32.mrb[0].mxu0
    %v951 = vadd.f32 %v587, %v950
    %952 = vmatprep.mubr.bf16.mxu0 %v512
    %953 = vmatmul.mubr.bf16.gmra.mrb[0].mxu0 %v511
    %v954 = vpop.f32.mrb[0].mxu0
    %v955 = vadd.f32 %v583, %v954
    %v956 = vpop.f32.mrb[0].mxu0
    %v957 = vadd.f32 %v587, %v956
    %v958 = vpop.f32.mrb[0].mxu0
    %v959 = vpop.f32.mrb[0].mxu0
    %960 = vdwg.mxu0
    %961 = vmatprep.subr.bf16.mxu0 %v815
    %962 = vmatpush1.bf16.msra.mxu0 %v814
    %963 = vmatprep.subr.bf16.mxu0 %v817
    %964 = vmatpush1.bf16.msra.mxu0 %v816
    %965 = vmatprep.subr.bf16.mxu0 %v819
    %966 = vmatpush1.bf16.msra.mxu0 %v818
    %967 = vmatprep.subr.bf16.mxu0 %v821
    %968 = vmatpush1.bf16.msra.mxu0 %v820
    %969 = vmatprep.subr.bf16.mxu0 %v823
    %970 = vmatpush1.bf16.msra.mxu0 %v822
    %971 = vmatprep.subr.bf16.mxu0 %v825
    %972 = vmatpush1.bf16.msra.mxu0 %v824
    %973 = vmatprep.subr.bf16.mxu0 %v827
    %974 = vmatpush1.bf16.msra.mxu0 %v826
    %975 = vmatprep.subr.bf16.mxu0 %v829
    %976 = vmatpush1.bf16.msra.mxu0 %v828
    %977 = vmatprep.subr.bf16.mxu0 %v831
    %978 = vmatpush1.bf16.msra.mxu0 %v830
    %979 = vmatprep.subr.bf16.mxu0 %v833
    %980 = vmatpush1.bf16.msra.mxu0 %v832
    %981 = vmatprep.subr.bf16.mxu0 %v835
    %982 = vmatpush1.bf16.msra.mxu0 %v834
    %983 = vmatprep.subr.bf16.mxu0 %v837
    %984 = vmatpush1.bf16.msra.mxu0 %v836
    %985 = vmatprep.subr.bf16.mxu0 %v839
    %986 = vmatpush1.bf16.msra.mxu0 %v838
    %987 = vmatprep.subr.bf16.mxu0 %v841
    %988 = vmatpush1.bf16.msra.mxu0 %v840
    %989 = vmatprep.subr.bf16.mxu0 %v843
    %990 = vmatpush1.bf16.msra.mxu0 %v842
    %991 = vmatprep.subr.bf16.mxu0 %v845
    %992 = vmatpush1.bf16.msra.mxu0 %v844
    %993 = vmatprep.mubr.bf16.mxu0 %v510
    %994 = vmatmul.mubr.bf16.gmra.mrb[0].mxu0 %v509
    %v995 = vpop.f32.mrb[0].mxu0
    %v996 = vadd.f32 %v945, %v995
    %v997 = vpop.f32.mrb[0].mxu0
    %v998 = vadd.f32 %v947, %v997
    %v999 = vpop.f32.mrb[0].mxu0
    %v1000 = vadd.f32 %v949, %v999
    %v1001 = vpop.f32.mrb[0].mxu0
    %v1002 = vadd.f32 %v951, %v1001
    %1003 = vmatprep.mubr.bf16.mxu0 %v514
    %1004 = vmatmul.mubr.bf16.gmra.mrb[0].mxu0 %v513
    %v1005 = vpop.f32.mrb[0].mxu0
    %v1006 = vadd.f32 %v955, %v1005
    %v1007 = vpop.f32.mrb[0].mxu0
    %v1008 = vadd.f32 %v957, %v1007
    %v1009 = vpop.f32.mrb[0].mxu0
    %v1010 = vpop.f32.mrb[0].mxu0
    %1011 = vdwg.mxu0
    %v1012 = vmax.f32 %v996, 0.0
    %v1013 = vmax.f32 %v998, 0.0
    %v1014 = vmax.f32 %v1000, 0.0
    %v1015 = vmax.f32 %v1002, 0.0
    %v1016 = vmax.f32 %v1006, 0.0
    %v1017 = vmax.f32 %v1008, 0.0
    %v1018 = vpack.c.bf16 %v1014, %v1012
    %v1019 = vpack.c.bf16 %v1015, %v1013
    %v1020 = vpack.c.bf16 %v1016, %v1016
    %v1021 = vpack.c.bf16 %v1017, %v1017
    %v1022 = vld [vmem:[%s8] sm:$0xf]
    %v1023 = vld [vmem:[%s8 + $0x4] sm:$0xf]
    %v1024 = vld [vmem:[%s8 + $0x8] sm:$0xf]
    %v1025 = vld [vmem:[%s8 + $0xc] sm:$0xf]
    %v1026 = vld [vmem:[%s8 + $0x10] sm:$0xf]
    %v1027 = vld [vmem:[%s8 + $0x14] sm:$0xf]
    %v1028 = vld [vmem:[%s8 + $0x18] sm:$0xf]
    %v1029 = vld [vmem:[%s8 + $0x1c] sm:$0xf]
    %v1030 = vld [vmem:[%s8 + $0x20] sm:$0xf]
    %v1031 = vld [vmem:[%s8 + $0x24] sm:$0xf]
    %v1032 = vld [vmem:[%s8 + $0x28] sm:$0xf]
    %v1033 = vld [vmem:[%s8 + $0x2c] sm:$0xf]
    %v1034 = vld [vmem:[%s8 + $0x30] sm:$0xf]
    %v1035 = vld [vmem:[%s8 + $0x34] sm:$0xf]
    %v1036 = vld [vmem:[%s8 + $0x38] sm:$0xf]
    %v1037 = vld [vmem:[%s8 + $0x3c] sm:$0xf]
    %v1038 = vld [vmem:[%s8 + $0x40] sm:$0xf]
    %v1039 = vld [vmem:[%s8 + $0x44] sm:$0xf]
    %v1040 = vld [vmem:[%s8 + $0x48] sm:$0xf]
    %v1041 = vld [vmem:[%s8 + $0x4c] sm:$0xf]
    %v1042 = vld [vmem:[%s8 + $0x50] sm:$0xf]
    %v1043 = vld [vmem:[%s8 + $0x54] sm:$0xf]
    %v1044 = vld [vmem:[%s8 + $0x58] sm:$0xf]
    %v1045 = vld [vmem:[%s8 + $0x5c] sm:$0xf]
    %v1046 = vld [vmem:[%s8 + $0x60] sm:$0xf]
    %v1047 = vld [vmem:[%s8 + $0x64] sm:$0xf]
    %v1048 = vld [vmem:[%s8 + $0x68] sm:$0xf]
    %v1049 = vld [vmem:[%s8 + $0x6c] sm:$0xf]
    %v1050 = vld [vmem:[%s8 + $0x70] sm:$0xf]
    %v1051 = vld [vmem:[%s8 + $0x74] sm:$0xf]
    %v1052 = vld [vmem:[%s8 + $0x78] sm:$0xf]
    %v1053 = vld [vmem:[%s8 + $0x7c] sm:$0xf]
    %v1055 = vlaneseq
    %v1056 = vshrl.u32 %v1055, 7
    %v1057 = vsub.s32 0, %v1056
    %v1058 = vrot.slane %v218, %v1057
    %v1092 = vunpack.c.l.b16 %v1022
    %v1093 = vunpack.c.l.b16 %v1023
    %v1094 = vunpack.c.l.b16 %v1024
    %v1095 = vunpack.c.l.b16 %v1025
    %v1096 = vunpack.c.l.b16 %v1026
    %v1097 = vunpack.c.l.b16 %v1027
    %v1098 = vunpack.c.l.b16 %v1028
    %v1099 = vunpack.c.l.b16 %v1029
    %v1100 = vunpack.c.l.b16 %v1030
    %v1101 = vunpack.c.l.b16 %v1031
    %v1102 = vunpack.c.l.b16 %v1032
    %v1103 = vunpack.c.l.b16 %v1033
    %v1104 = vunpack.c.l.b16 %v1034
    %v1105 = vunpack.c.l.b16 %v1035
    %v1106 = vunpack.c.l.b16 %v1036
    %v1107 = vunpack.c.l.b16 %v1037
    %v1108 = vunpack.c.l.b16 %v1038
    %v1109 = vunpack.c.l.b16 %v1039
    %v1110 = vunpack.c.l.b16 %v1040
    %v1111 = vunpack.c.l.b16 %v1041
    %v1112 = vunpack.c.l.b16 %v1042
    %v1113 = vunpack.c.l.b16 %v1043
    %v1114 = vunpack.c.l.b16 %v1044
    %v1115 = vunpack.c.l.b16 %v1045
    %v1116 = vunpack.c.l.b16 %v1046
    %v1117 = vunpack.c.l.b16 %v1047
    %v1118 = vunpack.c.l.b16 %v1048
    %v1119 = vunpack.c.l.b16 %v1049
    %v1120 = vunpack.c.l.b16 %v1050
    %v1121 = vunpack.c.l.b16 %v1051
    %v1122 = vunpack.c.l.b16 %v1052
    %v1123 = vunpack.c.l.b16 %v1053
    %v1124 = vpack.c.b16 %v1093, %v1092
    %v1125 = vpack.c.b16 %v1095, %v1094
    %v1126 = vpack.c.b16 %v1097, %v1096
    %v1127 = vpack.c.b16 %v1099, %v1098
    %v1128 = vpack.c.b16 %v1101, %v1100
    %v1129 = vpack.c.b16 %v1103, %v1102
    %v1130 = vpack.c.b16 %v1105, %v1104
    %v1131 = vpack.c.b16 %v1107, %v1106
    %v1132 = vpack.c.b16 %v1109, %v1108
    %v1133 = vpack.c.b16 %v1111, %v1110
    %v1134 = vpack.c.b16 %v1113, %v1112
    %v1135 = vpack.c.b16 %v1115, %v1114
    %v1136 = vpack.c.b16 %v1117, %v1116
    %v1137 = vpack.c.b16 %v1119, %v1118
    %v1138 = vpack.c.b16 %v1121, %v1120
    %v1139 = vpack.c.b16 %v1123, %v1122
    %1156 = vmatprep.subr.bf16.mxu0 0
    %1157 = vmatpush1.bf16.msra.mxu0 %v1124
    %1158 = vmatprep.subr.bf16.mxu0 0
    %1159 = vmatpush1.bf16.msra.mxu0 %v1125
    %1160 = vmatprep.subr.bf16.mxu0 0
    %1161 = vmatpush1.bf16.msra.mxu0 %v1126
    %1162 = vmatprep.subr.bf16.mxu0 0
    %1163 = vmatpush1.bf16.msra.mxu0 %v1127
    %1164 = vmatprep.subr.bf16.mxu0 0
    %1165 = vmatpush1.bf16.msra.mxu0 %v1128
    %1166 = vmatprep.subr.bf16.mxu0 0
    %1167 = vmatpush1.bf16.msra.mxu0 %v1129
    %1168 = vmatprep.subr.bf16.mxu0 0
    %1169 = vmatpush1.bf16.msra.mxu0 %v1130
    %1170 = vmatprep.subr.bf16.mxu0 0
    %1171 = vmatpush1.bf16.msra.mxu0 %v1131
    %1172 = vmatprep.subr.bf16.mxu0 0
    %1173 = vmatpush1.bf16.msra.mxu0 %v1132
    %1174 = vmatprep.subr.bf16.mxu0 0
    %1175 = vmatpush1.bf16.msra.mxu0 %v1133
    %1176 = vmatprep.subr.bf16.mxu0 0
    %1177 = vmatpush1.bf16.msra.mxu0 %v1134
    %1178 = vmatprep.subr.bf16.mxu0 0
    %1179 = vmatpush1.bf16.msra.mxu0 %v1135
    %1180 = vmatprep.subr.bf16.mxu0 0
    %1181 = vmatpush1.bf16.msra.mxu0 %v1136
    %1182 = vmatprep.subr.bf16.mxu0 0
    %1183 = vmatpush1.bf16.msra.mxu0 %v1137
    %1184 = vmatprep.subr.bf16.mxu0 0
    %1185 = vmatpush1.bf16.msra.mxu0 %v1138
    %1186 = vmatprep.subr.bf16.mxu0 0
    %1187 = vmatpush1.bf16.msra.mxu0 %v1139
    %1188 = vmatprep.mubr.bf16.mxu0 %v1019
    %1189 = vmatmul.mubr.bf16.gmra.mrb[0].mxu0 %v1018
    %v1190 = vpop.f32.mrb[0].mxu0
    %v1191 = vadd.f32 %v1058, %v1190
    %v1192 = vpop.f32.mrb[0].mxu0
    %v1193 = vpop.f32.mrb[0].mxu0
    %v1194 = vadd.f32 %v1058, %v1193
    %v1195 = vpop.f32.mrb[0].mxu0
    %1196 = vmatprep.mubr.bf16.mxu0 %v1021
    %1197 = vmatmul.mubr.bf16.gmra.mrb[0].mxu0 %v1020
    %v1198 = vpop.f32.mrb[0].mxu0
    %v1199 = vadd.f32 %v1058, %v1198
    %v1200 = vpop.f32.mrb[0].mxu0
    %v1201 = vpop.f32.mrb[0].mxu0
    %v1202 = vpop.f32.mrb[0].mxu0
    %1203 = vdwg.mxu0
    %v1204 = vmax.f32 %v1191, 0.0
    %v1205 = vmax.f32 %v1194, 0.0
    %v1206 = vmax.f32 %v1199, 0.0
    %v1207 = vpack.c.bf16 %v1205, %v1204
    %v1208 = vpack.c.bf16 %v1206, %v1206
    %v1209 = vld [vmem:[%s9] sm:$0xf]
    %v1210 = vld [vmem:[%s9 + $0x4] sm:$0xf]
    %v1211 = vld [vmem:[%s9 + $0x8] sm:$0xf]
    %v1212 = vld [vmem:[%s9 + $0xc] sm:$0xf]
    %v1213 = vld [vmem:[%s9 + $0x10] sm:$0xf]
    %v1214 = vld [vmem:[%s9 + $0x14] sm:$0xf]
    %v1215 = vld [vmem:[%s9 + $0x18] sm:$0xf]
    %v1216 = vld [vmem:[%s9 + $0x1c] sm:$0xf]
    %v1218 = vlaneseq
    %v1219 = vshrl.u32 %v1218, 7
    %v1220 = vsub.s32 0, %v1219
    %v1221 = vrot.slane %v219, %v1220
    %v1231 = vunpack.c.l.b16 %v1209
    %v1232 = vunpack.c.l.b16 %v1210
    %v1233 = vunpack.c.l.b16 %v1211
    %v1234 = vunpack.c.l.b16 %v1212
    %v1235 = vunpack.c.l.b16 %v1213
    %v1236 = vunpack.c.l.b16 %v1214
    %v1237 = vunpack.c.l.b16 %v1215
    %v1238 = vunpack.c.l.b16 %v1216
    %v1239 = vpack.c.b16 %v1232, %v1231
    %v1240 = vpack.c.b16 %v1234, %v1233
    %v1241 = vpack.c.b16 %v1236, %v1235
    %v1242 = vpack.c.b16 %v1238, %v1237
    %vm1247 = vcmask 523264
    %v1249 = vsel %vm1247, %v1207, 0
    %v1252 = vsel %vm1247, %v1208, 0
    %1254 = vmatprep.subr.bf16.mxu0 0
    %1255 = vmatpush1.bf16.msra.mxu0 %v1239
    %1256 = vmatprep.subr.bf16.mxu0 0
    %1257 = vmatpush1.bf16.msra.mxu0 %v1240
    %1258 = vmatprep.subr.bf16.mxu0 0
    %1259 = vmatpush1.bf16.msra.mxu0 %v1241
    %1260 = vmatprep.subr.bf16.mxu0 0
    %1261 = vmatpush1.bf16.msra.mxu0 %v1242
    %1262 = vmatprep.subr.bf16.mxu0 0
    %1263 = vmatpush1.bf16.msra.mxu0 0
    %1264 = vmatprep.subr.bf16.mxu0 0
    %1265 = vmatpush1.bf16.msra.mxu0 0
    %1266 = vmatprep.subr.bf16.mxu0 0
    %1267 = vmatpush1.bf16.msra.mxu0 0
    %1268 = vmatprep.subr.bf16.mxu0 0
    %1269 = vmatpush1.bf16.msra.mxu0 0
    %1270 = vmatprep.subr.bf16.mxu0 0
    %1271 = vmatpush1.bf16.msra.mxu0 0
    %1272 = vmatprep.subr.bf16.mxu0 0
    %1273 = vmatpush1.bf16.msra.mxu0 0
    %1274 = vmatprep.subr.bf16.mxu0 0
    %1275 = vmatpush1.bf16.msra.mxu0 0
    %1276 = vmatprep.subr.bf16.mxu0 0
    %1277 = vmatpush1.bf16.msra.mxu0 0
    %1278 = vmatprep.subr.bf16.mxu0 0
    %1279 = vmatpush1.bf16.msra.mxu0 0
    %1280 = vmatprep.subr.bf16.mxu0 0
    %1281 = vmatpush1.bf16.msra.mxu0 0
    %1282 = vmatprep.subr.bf16.mxu0 0
    %1283 = vmatpush1.bf16.msra.mxu0 0
    %1284 = vmatprep.subr.bf16.mxu0 0
    %1285 = vmatpush1.bf16.msra.mxu0 0
    %1286 = vmatprep.mubr.bf16.mxu0 0
    %1287 = vmatmul.mubr.bf16.gmra.mrb[0].mxu0 %v1249
    %v1288 = vpop.f32.mrb[0].mxu0
    %v1289 = vadd.f32 %v1221, %v1288
    %v1290 = vpop.f32.mrb[0].mxu0
    %v1291 = vpop.f32.mrb[0].mxu0
    %v1292 = vadd.f32 %v1221, %v1291
    %v1293 = vpop.f32.mrb[0].mxu0
    %1294 = vmatprep.mubr.bf16.mxu0 0
    %1295 = vmatmul.mubr.bf16.gmra.mrb[0].mxu0 %v1252
    %v1296 = vpop.f32.mrb[0].mxu0
    %v1297 = vadd.f32 %v1221, %v1296
    %v1298 = vpop.f32.mrb[0].mxu0
    %v1299 = vpop.f32.mrb[0].mxu0
    %v1300 = vpop.f32.mrb[0].mxu0
    %1301 = vdwg.mxu0
    %v1302 = vmul.f32 %v1289, 0.5
    %v1303 = vmul.f32 %v1292, 0.5
    %v1304 = vmul.f32 %v1297, 0.5
    %v1305 = vmul.f32 %v1302, 1.442695
    %v1306 = vpow.pop %v1305
    %v1307 = vmul.f32 %v1303, 1.442695
    %v1308 = vpow.pop %v1307
    %v1309 = vmul.f32 %v1304, 1.442695
    %v1310 = vpow.pop %v1309
    %1314 = vrot.lane.b32.xlu0 %v1306, 96
    %v1315 = vpop.permute.xlu0 %1314
    %1316 = vrot.lane.b32.xlu0 %v1308, 96
    %v1317 = vpop.permute.xlu0 %1316
    %1318 = vrot.lane.b32.xlu0 %v1310, 96
    %v1319 = vpop.permute.xlu0 %1318
    %v1323 = vmul.f32 %v213, %v1315
    %v1324 = vmul.f32 %v214, %v1317
    %v1325 = vmul.f32 %v215, %v1319
    %v1326 = vadd.f32 %v1289, %v1323
    %v1327 = vadd.f32 %v1292, %v1324
    %v1328 = vadd.f32 %v1297, %v1325
    %v1329 = vld [vmem:[#allocation3] sm:$0xff]
    %v1330 = vld [vmem:[#allocation3 + $0x8] sm:$0xff]
    %v1331 = vld [vmem:[#allocation3 + $0x10] sm:$0xff]
    %v1332 = vld [vmem:[%s17] sm:$0xff]
    %v1333 = vld [vmem:[%s17 + $0x8] sm:$0xff]
    %v1334 = vld [vmem:[%s17 + $0x10] sm:$0xff]
    %v1335 = vld [vmem:[#allocation20] sm:$0xf]
    %v1336 = vld [vmem:[#allocation20 + $0x4] sm:$0x3]
    %v1337 = vld [vmem:[#allocation20 + $0x6] sm:$0x1]
    %v1338 = vld [vmem:[#allocation20 + $0x7] sm:$0x1]
    %v1339 = vpack.c.bf16 %v1330, %v1329
    %v1340 = vpack.c.bf16 %v1331, %v1331
    %v1341 = vld [vmem:[%s11] sm:$0xff]
    %v1342 = vld [vmem:[%s11 + $0x8] sm:$0xff]
    %v1343 = vld [vmem:[%s11 + $0x10] sm:$0xff]
    %v1344 = vld [vmem:[%s11 + $0x18] sm:$0xff]
    %v1345 = vld [vmem:[%s11 + $0x20] sm:$0xff]
    %v1346 = vld [vmem:[%s11 + $0x28] sm:$0xff]
    %v1347 = vld [vmem:[%s11 + $0x30] sm:$0xff]
    %v1348 = vld [vmem:[%s11 + $0x38] sm:$0xff]
    %v1349 = vld [vmem:[%s11 + $0x40] sm:$0xff]
    %v1350 = vld [vmem:[%s11 + $0x48] sm:$0xff]
    %v1351 = vld [vmem:[%s11 + $0x50] sm:$0xff]
    %v1352 = vld [vmem:[%s11 + $0x58] sm:$0xff]
    %v1353 = vld [vmem:[%s11 + $0x60] sm:$0xff]
    %v1354 = vld [vmem:[%s11 + $0x68] sm:$0xff]
    %v1355 = vld [vmem:[%s11 + $0x70] sm:$0xff]
    %v1356 = vld [vmem:[%s11 + $0x78] sm:$0xff]
    %v1357 = vld [vmem:[%s11 + $0x80] sm:$0xff]
    %v1358 = vld [vmem:[%s11 + $0x88] sm:$0xff]
    %v1359 = vld [vmem:[%s11 + $0x90] sm:$0xff]
    %v1360 = vld [vmem:[%s11 + $0x98] sm:$0xff]
    %v1362 = vlaneseq
    %v1363 = vshrl.u32 %v1362, 7
    %v1364 = vsub.s32 0, %v1363
    %v1365 = vrot.slane %v1335, %v1364
    %v1366 = vlaneseq
    %v1367 = vshrl.u32 %v1366, 7
    %v1368 = vsub.s32 1, %v1367
    %v1369 = vrot.slane %v1335, %v1368
    %v1370 = vlaneseq
    %v1371 = vshrl.u32 %v1370, 7
    %v1372 = vsub.s32 2, %v1371
    %v1373 = vrot.slane %v1335, %v1372
    %v1374 = vlaneseq
    %v1375 = vshrl.u32 %v1374, 7
    %v1376 = vsub.s32 3, %v1375
    %v1377 = vrot.slane %v1335, %v1376
    %v1402 = vunpack.c.l.b16 %v1341
    %v1403 = vunpack.c.h.b16 %v1341
    %v1404 = vunpack.c.l.b16 %v1342
    %v1405 = vunpack.c.h.b16 %v1342
    %v1406 = vunpack.c.l.b16 %v1343
    %v1407 = vunpack.c.h.b16 %v1343
    %v1408 = vunpack.c.l.b16 %v1344
    %v1409 = vunpack.c.h.b16 %v1344
    %v1410 = vunpack.c.l.b16 %v1345
    %v1411 = vunpack.c.h.b16 %v1345
    %v1412 = vunpack.c.l.b16 %v1346
    %v1413 = vunpack.c.h.b16 %v1346
    %v1414 = vunpack.c.l.b16 %v1347
    %v1415 = vunpack.c.h.b16 %v1347
    %v1416 = vunpack.c.l.b16 %v1348
    %v1417 = vunpack.c.h.b16 %v1348
    %v1418 = vunpack.c.l.b16 %v1349
    %v1419 = vunpack.c.h.b16 %v1349
    %v1420 = vunpack.c.l.b16 %v1350
    %v1421 = vunpack.c.h.b16 %v1350
    %v1422 = vunpack.c.l.b16 %v1351
    %v1423 = vunpack.c.h.b16 %v1351
    %v1424 = vunpack.c.l.b16 %v1352
    %v1425 = vunpack.c.h.b16 %v1352
    %v1426 = vunpack.c.l.b16 %v1353
    %v1427 = vunpack.c.h.b16 %v1353
    %v1428 = vunpack.c.l.b16 %v1354
    %v1429 = vunpack.c.h.b16 %v1354
    %v1430 = vunpack.c.l.b16 %v1355
    %v1431 = vunpack.c.h.b16 %v1355
    %v1432 = vunpack.c.l.b16 %v1356
    %v1433 = vunpack.c.h.b16 %v1356
    %v1434 = vunpack.c.l.b16 %v1357
    %v1435 = vunpack.c.h.b16 %v1357
    %v1436 = vunpack.c.l.b16 %v1358
    %v1437 = vunpack.c.h.b16 %v1358
    %v1438 = vunpack.c.l.b16 %v1359
    %v1439 = vunpack.c.h.b16 %v1359
    %v1440 = vunpack.c.l.b16 %v1360
    %v1441 = vunpack.c.h.b16 %v1360
    %v1442 = vpack.c.b16 %v1406, %v1402
    %v1443 = vpack.c.b16 %v1407, %v1403
    %v1444 = vpack.c.b16 %v1408, %v1404
    %v1445 = vpack.c.b16 %v1409, %v1405
    %v1446 = vpack.c.b16 %v1414, %v1410
    %v1447 = vpack.c.b16 %v1415, %v1411
    %v1448 = vpack.c.b16 %v1416, %v1412
    %v1449 = vpack.c.b16 %v1417, %v1413
    %v1450 = vpack.c.b16 %v1422, %v1418
    %v1451 = vpack.c.b16 %v1423, %v1419
    %v1452 = vpack.c.b16 %v1424, %v1420
    %v1453 = vpack.c.b16 %v1425, %v1421
    %v1454 = vpack.c.b16 %v1430, %v1426
    %v1455 = vpack.c.b16 %v1431, %v1427
    %v1456 = vpack.c.b16 %v1432, %v1428
    %v1457 = vpack.c.b16 %v1433, %v1429
    %v1458 = vpack.c.b16 %v1438, %v1434
    %v1459 = vpack.c.b16 %v1439, %v1435
    %v1460 = vpack.c.b16 %v1440, %v1436
    %v1461 = vpack.c.b16 %v1441, %v1437
    %v1483 = vsel %vm198, %v1339, 0
    %v1486 = vsel %vm198, %v1340, 0
    %1488 = vmatprep.subr.bf16.mxu0 %v1443
    %1489 = vmatpush1.bf16.msra.mxu0 %v1442
    %1490 = vmatprep.subr.bf16.mxu0 %v1447
    %1491 = vmatpush1.bf16.msra.mxu0 %v1446
    %1492 = vmatprep.subr.bf16.mxu0 %v1451
    %1493 = vmatpush1.bf16.msra.mxu0 %v1450
    %1494 = vmatprep.subr.bf16.mxu0 %v1455
    %1495 = vmatpush1.bf16.msra.mxu0 %v1454
    %1496 = vmatprep.subr.bf16.mxu0 %v1459
    %1497 = vmatpush1.bf16.msra.mxu0 %v1458
    %1498 = vmatprep.subr.bf16.mxu0 0
    %1499 = vmatpush1.bf16.msra.mxu0 0
    %1500 = vmatprep.subr.bf16.mxu0 0
    %1501 = vmatpush1.bf16.msra.mxu0 0
    %1502 = vmatprep.subr.bf16.mxu0 0
    %1503 = vmatpush1.bf16.msra.mxu0 0
    %1504 = vmatprep.subr.bf16.mxu0 0
    %1505 = vmatpush1.bf16.msra.mxu0 0
    %1506 = vmatprep.subr.bf16.mxu0 0
    %1507 = vmatpush1.bf16.msra.mxu0 0
    %1508 = vmatprep.subr.bf16.mxu0 0
    %1509 = vmatpush1.bf16.msra.mxu0 0
    %1510 = vmatprep.subr.bf16.mxu0 0
    %1511 = vmatpush1.bf16.msra.mxu0 0
    %1512 = vmatprep.subr.bf16.mxu0 0
    %1513 = vmatpush1.bf16.msra.mxu0 0
    %1514 = vmatprep.subr.bf16.mxu0 0
    %1515 = vmatpush1.bf16.msra.mxu0 0
    %1516 = vmatprep.subr.bf16.mxu0 0
    %1517 = vmatpush1.bf16.msra.mxu0 0
    %1518 = vmatprep.subr.bf16.mxu0 0
    %1519 = vmatpush1.bf16.msra.mxu0 0
    %1520 = vmatprep.mubr.bf16.mxu0 0
    %1521 = vmatmul.mubr.bf16.gmra.mrb[0].mxu0 %v1483
    %v1522 = vpop.f32.mrb[0].mxu0
    %v1523 = vadd.f32 %v1365, %v1522
    %v1524 = vpop.f32.mrb[0].mxu0
    %v1525 = vadd.f32 %v1369, %v1524
    %v1526 = vpop.f32.mrb[0].mxu0
    %v1527 = vadd.f32 %v1365, %v1526
    %v1528 = vpop.f32.mrb[0].mxu0
    %v1529 = vadd.f32 %v1369, %v1528
    %1530 = vmatprep.mubr.bf16.mxu0 0
    %1531 = vmatmul.mubr.bf16.gmra.mrb[0].mxu0 %v1486
    %v1532 = vpop.f32.mrb[0].mxu0
    %v1533 = vadd.f32 %v1365, %v1532
    %v1534 = vpop.f32.mrb[0].mxu0
    %v1535 = vadd.f32 %v1369, %v1534
    %v1536 = vpop.f32.mrb[0].mxu0
    %v1537 = vpop.f32.mrb[0].mxu0
    %1538 = vdwg.mxu0
    %1539 = vmatprep.subr.bf16.mxu0 %v1445
    %1540 = vmatpush1.bf16.msra.mxu0 %v1444
    %1541 = vmatprep.subr.bf16.mxu0 %v1449
    %1542 = vmatpush1.bf16.msra.mxu0 %v1448
    %1543 = vmatprep.subr.bf16.mxu0 %v1453
    %1544 = vmatpush1.bf16.msra.mxu0 %v1452
    %1545 = vmatprep.subr.bf16.mxu0 %v1457
    %1546 = vmatpush1.bf16.msra.mxu0 %v1456
    %1547 = vmatprep.subr.bf16.mxu0 %v1461
    %1548 = vmatpush1.bf16.msra.mxu0 %v1460
    %1549 = vmatprep.subr.bf16.mxu0 0
    %1550 = vmatpush1.bf16.msra.mxu0 0
    %1551 = vmatprep.subr.bf16.mxu0 0
    %1552 = vmatpush1.bf16.msra.mxu0 0
    %1553 = vmatprep.subr.bf16.mxu0 0
    %1554 = vmatpush1.bf16.msra.mxu0 0
    %1555 = vmatprep.subr.bf16.mxu0 0
    %1556 = vmatpush1.bf16.msra.mxu0 0
    %1557 = vmatprep.subr.bf16.mxu0 0
    %1558 = vmatpush1.bf16.msra.mxu0 0
    %1559 = vmatprep.subr.bf16.mxu0 0
    %1560 = vmatpush1.bf16.msra.mxu0 0
    %1561 = vmatprep.subr.bf16.mxu0 0
    %1562 = vmatpush1.bf16.msra.mxu0 0
    %1563 = vmatprep.subr.bf16.mxu0 0
    %1564 = vmatpush1.bf16.msra.mxu0 0
    %1565 = vmatprep.subr.bf16.mxu0 0
    %1566 = vmatpush1.bf16.msra.mxu0 0
    %1567 = vmatprep.subr.bf16.mxu0 0
    %1568 = vmatpush1.bf16.msra.mxu0 0
    %1569 = vmatprep.subr.bf16.mxu0 0
    %1570 = vmatpush1.bf16.msra.mxu0 0
    %1571 = vmatprep.mubr.bf16.mxu0 0
    %1572 = vmatmul.mubr.bf16.gmra.mrb[0].mxu0 %v1483
    %v1573 = vpop.f32.mrb[0].mxu0
    %v1574 = vadd.f32 %v1373, %v1573
    %v1575 = vpop.f32.mrb[0].mxu0
    %v1576 = vadd.f32 %v1377, %v1575
    %v1577 = vpop.f32.mrb[0].mxu0
    %v1578 = vadd.f32 %v1373, %v1577
    %v1579 = vpop.f32.mrb[0].mxu0
    %v1580 = vadd.f32 %v1377, %v1579
    %1581 = vmatprep.mubr.bf16.mxu0 0
    %1582 = vmatmul.mubr.bf16.gmra.mrb[0].mxu0 %v1486
    %v1583 = vpop.f32.mrb[0].mxu0
    %v1584 = vadd.f32 %v1373, %v1583
    %v1585 = vpop.f32.mrb[0].mxu0
    %v1586 = vadd.f32 %v1377, %v1585
    %v1587 = vpop.f32.mrb[0].mxu0
    %v1588 = vpop.f32.mrb[0].mxu0
    %1589 = vdwg.mxu0
    %v1590 = vmax.f32 %v1523, 0.0
    %v1591 = vmax.f32 %v1525, 0.0
    %v1592 = vmax.f32 %v1574, 0.0
    %v1593 = vmax.f32 %v1576, 0.0
    %v1594 = vmax.f32 %v1527, 0.0
    %v1595 = vmax.f32 %v1529, 0.0
    %v1596 = vmax.f32 %v1578, 0.0
    %v1597 = vmax.f32 %v1580, 0.0
    %v1598 = vmax.f32 %v1533, 0.0
    %v1599 = vmax.f32 %v1535, 0.0
    %v1600 = vmax.f32 %v1584, 0.0
    %v1601 = vmax.f32 %v1586, 0.0
    %v1602 = vpack.c.bf16 %v1594, %v1590
    %v1603 = vpack.c.bf16 %v1595, %v1591
    %v1604 = vpack.c.bf16 %v1596, %v1592
    %v1605 = vpack.c.bf16 %v1597, %v1593
    %v1606 = vpack.c.bf16 %v1598, %v1598
    %v1607 = vpack.c.bf16 %v1599, %v1599
    %v1608 = vpack.c.bf16 %v1600, %v1600
    %v1609 = vpack.c.bf16 %v1601, %v1601
    %v1610 = vld [vmem:[#allocation17] sm:$0xff]
    %v1611 = vld [vmem:[#allocation17 + $0x8] sm:$0xff]
    %v1612 = vld [vmem:[#allocation17 + $0x10] sm:$0xff]
    %v1613 = vld [vmem:[#allocation17 + $0x18] sm:$0xff]
    %v1614 = vld [vmem:[#allocation17 + $0x20] sm:$0xff]
    %v1615 = vld [vmem:[#allocation17 + $0x28] sm:$0xff]
    %v1616 = vld [vmem:[#allocation17 + $0x30] sm:$0xff]
    %v1617 = vld [vmem:[#allocation17 + $0x38] sm:$0xff]
    %v1618 = vld [vmem:[#allocation17 + $0x40] sm:$0xff]
    %v1619 = vld [vmem:[#allocation17 + $0x48] sm:$0xff]
    %v1620 = vld [vmem:[#allocation17 + $0x50] sm:$0xff]
    %v1621 = vld [vmem:[#allocation17 + $0x58] sm:$0xff]
    %v1622 = vld [vmem:[#allocation17 + $0x60] sm:$0xff]
    %v1623 = vld [vmem:[#allocation17 + $0x68] sm:$0xff]
    %v1624 = vld [vmem:[#allocation17 + $0x70] sm:$0xff]
    %v1625 = vld [vmem:[#allocation17 + $0x78] sm:$0xff]
    %v1626 = vld [vmem:[#allocation17 + $0x80] sm:$0xff]
    %v1627 = vld [vmem:[#allocation17 + $0x88] sm:$0xff]
    %v1628 = vld [vmem:[#allocation17 + $0x90] sm:$0xff]
    %v1629 = vld [vmem:[#allocation17 + $0x98] sm:$0xff]
    %v1630 = vld [vmem:[#allocation17 + $0xa0] sm:$0xff]
    %v1631 = vld [vmem:[#allocation17 + $0xa8] sm:$0xff]
    %v1632 = vld [vmem:[#allocation17 + $0xb0] sm:$0xff]
    %v1633 = vld [vmem:[#allocation17 + $0xb8] sm:$0xff]
    %v1634 = vld [vmem:[#allocation17 + $0xc0] sm:$0xff]
    %v1635 = vld [vmem:[#allocation17 + $0xc8] sm:$0xff]
    %v1636 = vld [vmem:[#allocation17 + $0xd0] sm:$0xff]
    %v1637 = vld [vmem:[#allocation17 + $0xd8] sm:$0xff]
    %v1638 = vld [vmem:[#allocation17 + $0xe0] sm:$0xff]
    %v1639 = vld [vmem:[#allocation17 + $0xe8] sm:$0xff]
    %v1640 = vld [vmem:[#allocation17 + $0xf0] sm:$0xff]
    %v1641 = vld [vmem:[#allocation17 + $0xf8] sm:$0xff]
    %v1642 = vld [vmem:[#allocation17 + $0x100] sm:$0xff]
    %v1643 = vld [vmem:[#allocation17 + $0x108] sm:$0xff]
    %v1644 = vld [vmem:[#allocation17 + $0x110] sm:$0xff]
    %v1645 = vld [vmem:[#allocation17 + $0x118] sm:$0xff]
    %v1646 = vld [vmem:[#allocation17 + $0x120] sm:$0xff]
    %v1647 = vld [vmem:[#allocation17 + $0x128] sm:$0xff]
    %v1648 = vld [vmem:[#allocation17 + $0x130] sm:$0xff]
    %v1649 = vld [vmem:[#allocation17 + $0x138] sm:$0xff]
    %v1650 = vld [vmem:[#allocation17 + $0x140] sm:$0xff]
    %v1651 = vld [vmem:[#allocation17 + $0x148] sm:$0xff]
    %v1652 = vld [vmem:[#allocation17 + $0x150] sm:$0xff]
    %v1653 = vld [vmem:[#allocation17 + $0x158] sm:$0xff]
    %v1654 = vld [vmem:[#allocation17 + $0x160] sm:$0xff]
    %v1655 = vld [vmem:[#allocation17 + $0x168] sm:$0xff]
    %v1656 = vld [vmem:[#allocation17 + $0x170] sm:$0xff]
    %v1657 = vld [vmem:[#allocation17 + $0x178] sm:$0xff]
    %v1658 = vld [vmem:[#allocation17 + $0x180] sm:$0xff]
    %v1659 = vld [vmem:[#allocation17 + $0x188] sm:$0xff]
    %v1660 = vld [vmem:[#allocation17 + $0x190] sm:$0xff]
    %v1661 = vld [vmem:[#allocation17 + $0x198] sm:$0xff]
    %v1662 = vld [vmem:[#allocation17 + $0x1a0] sm:$0xff]
    %v1663 = vld [vmem:[#allocation17 + $0x1a8] sm:$0xff]
    %v1664 = vld [vmem:[#allocation17 + $0x1b0] sm:$0xff]
    %v1665 = vld [vmem:[#allocation17 + $0x1b8] sm:$0xff]
    %v1666 = vld [vmem:[#allocation17 + $0x1c0] sm:$0xff]
    %v1667 = vld [vmem:[#allocation17 + $0x1c8] sm:$0xff]
    %v1668 = vld [vmem:[#allocation17 + $0x1d0] sm:$0xff]
    %v1669 = vld [vmem:[#allocation17 + $0x1d8] sm:$0xff]
    %v1670 = vld [vmem:[#allocation17 + $0x1e0] sm:$0xff]
    %v1671 = vld [vmem:[#allocation17 + $0x1e8] sm:$0xff]
    %v1672 = vld [vmem:[#allocation17 + $0x1f0] sm:$0xff]
    %v1673 = vld [vmem:[#allocation17 + $0x1f8] sm:$0xff]
    %v1675 = vlaneseq
    %v1676 = vshrl.u32 %v1675, 7
    %v1677 = vsub.s32 0, %v1676
    %v1678 = vrot.slane %v1336, %v1677
    %v1679 = vlaneseq
    %v1680 = vshrl.u32 %v1679, 7
    %v1681 = vsub.s32 1, %v1680
    %v1682 = vrot.slane %v1336, %v1681
    %v1749 = vunpack.c.l.b16 %v1610
    %v1750 = vunpack.c.h.b16 %v1610
    %v1751 = vunpack.c.l.b16 %v1611
    %v1752 = vunpack.c.h.b16 %v1611
    %v1753 = vunpack.c.l.b16 %v1612
    %v1754 = vunpack.c.h.b16 %v1612
    %v1755 = vunpack.c.l.b16 %v1613
    %v1756 = vunpack.c.h.b16 %v1613
    %v1757 = vunpack.c.l.b16 %v1614
    %v1758 = vunpack.c.h.b16 %v1614
    %v1759 = vunpack.c.l.b16 %v1615
    %v1760 = vunpack.c.h.b16 %v1615
    %v1761 = vunpack.c.l.b16 %v1616
    %v1762 = vunpack.c.h.b16 %v1616
    %v1763 = vunpack.c.l.b16 %v1617
    %v1764 = vunpack.c.h.b16 %v1617
    %v1765 = vunpack.c.l.b16 %v1618
    %v1766 = vunpack.c.h.b16 %v1618
    %v1767 = vunpack.c.l.b16 %v1619
    %v1768 = vunpack.c.h.b16 %v1619
    %v1769 = vunpack.c.l.b16 %v1620
    %v1770 = vunpack.c.h.b16 %v1620
    %v1771 = vunpack.c.l.b16 %v1621
    %v1772 = vunpack.c.h.b16 %v1621
    %v1773 = vunpack.c.l.b16 %v1622
    %v1774 = vunpack.c.h.b16 %v1622
    %v1775 = vunpack.c.l.b16 %v1623
    %v1776 = vunpack.c.h.b16 %v1623
    %v1777 = vunpack.c.l.b16 %v1624
    %v1778 = vunpack.c.h.b16 %v1624
    %v1779 = vunpack.c.l.b16 %v1625
    %v1780 = vunpack.c.h.b16 %v1625
    %v1781 = vunpack.c.l.b16 %v1626
    %v1782 = vunpack.c.h.b16 %v1626
    %v1783 = vunpack.c.l.b16 %v1627
    %v1784 = vunpack.c.h.b16 %v1627
    %v1785 = vunpack.c.l.b16 %v1628
    %v1786 = vunpack.c.h.b16 %v1628
    %v1787 = vunpack.c.l.b16 %v1629
    %v1788 = vunpack.c.h.b16 %v1629
    %v1789 = vunpack.c.l.b16 %v1630
    %v1790 = vunpack.c.h.b16 %v1630
    %v1791 = vunpack.c.l.b16 %v1631
    %v1792 = vunpack.c.h.b16 %v1631
    %v1793 = vunpack.c.l.b16 %v1632
    %v1794 = vunpack.c.h.b16 %v1632
    %v1795 = vunpack.c.l.b16 %v1633
    %v1796 = vunpack.c.h.b16 %v1633
    %v1797 = vunpack.c.l.b16 %v1634
    %v1798 = vunpack.c.h.b16 %v1634
    %v1799 = vunpack.c.l.b16 %v1635
    %v1800 = vunpack.c.h.b16 %v1635
    %v1801 = vunpack.c.l.b16 %v1636
    %v1802 = vunpack.c.h.b16 %v1636
    %v1803 = vunpack.c.l.b16 %v1637
    %v1804 = vunpack.c.h.b16 %v1637
    %v1805 = vunpack.c.l.b16 %v1638
    %v1806 = vunpack.c.h.b16 %v1638
    %v1807 = vunpack.c.l.b16 %v1639
    %v1808 = vunpack.c.h.b16 %v1639
    %v1809 = vunpack.c.l.b16 %v1640
    %v1810 = vunpack.c.h.b16 %v1640
    %v1811 = vunpack.c.l.b16 %v1641
    %v1812 = vunpack.c.h.b16 %v1641
    %v1813 = vunpack.c.l.b16 %v1642
    %v1814 = vunpack.c.h.b16 %v1642
    %v1815 = vunpack.c.l.b16 %v1643
    %v1816 = vunpack.c.h.b16 %v1643
    %v1817 = vunpack.c.l.b16 %v1644
    %v1818 = vunpack.c.h.b16 %v1644
    %v1819 = vunpack.c.l.b16 %v1645
    %v1820 = vunpack.c.h.b16 %v1645
    %v1821 = vunpack.c.l.b16 %v1646
    %v1822 = vunpack.c.h.b16 %v1646
    %v1823 = vunpack.c.l.b16 %v1647
    %v1824 = vunpack.c.h.b16 %v1647
    %v1825 = vunpack.c.l.b16 %v1648
    %v1826 = vunpack.c.h.b16 %v1648
    %v1827 = vunpack.c.l.b16 %v1649
    %v1828 = vunpack.c.h.b16 %v1649
    %v1829 = vunpack.c.l.b16 %v1650
    %v1830 = vunpack.c.h.b16 %v1650
    %v1831 = vunpack.c.l.b16 %v1651
    %v1832 = vunpack.c.h.b16 %v1651
    %v1833 = vunpack.c.l.b16 %v1652
    %v1834 = vunpack.c.h.b16 %v1652
    %v1835 = vunpack.c.l.b16 %v1653
    %v1836 = vunpack.c.h.b16 %v1653
    %v1837 = vunpack.c.l.b16 %v1654
    %v1838 = vunpack.c.h.b16 %v1654
    %v1839 = vunpack.c.l.b16 %v1655
    %v1840 = vunpack.c.h.b16 %v1655
    %v1841 = vunpack.c.l.b16 %v1656
    %v1842 = vunpack.c.h.b16 %v1656
    %v1843 = vunpack.c.l.b16 %v1657
    %v1844 = vunpack.c.h.b16 %v1657
    %v1845 = vunpack.c.l.b16 %v1658
    %v1846 = vunpack.c.h.b16 %v1658
    %v1847 = vunpack.c.l.b16 %v1659
    %v1848 = vunpack.c.h.b16 %v1659
    %v1849 = vunpack.c.l.b16 %v1660
    %v1850 = vunpack.c.h.b16 %v1660
    %v1851 = vunpack.c.l.b16 %v1661
    %v1852 = vunpack.c.h.b16 %v1661
    %v1853 = vunpack.c.l.b16 %v1662
    %v1854 = vunpack.c.h.b16 %v1662
    %v1855 = vunpack.c.l.b16 %v1663
    %v1856 = vunpack.c.h.b16 %v1663
    %v1857 = vunpack.c.l.b16 %v1664
    %v1858 = vunpack.c.h.b16 %v1664
    %v1859 = vunpack.c.l.b16 %v1665
    %v1860 = vunpack.c.h.b16 %v1665
    %v1861 = vunpack.c.l.b16 %v1666
    %v1862 = vunpack.c.h.b16 %v1666
    %v1863 = vunpack.c.l.b16 %v1667
    %v1864 = vunpack.c.h.b16 %v1667
    %v1865 = vunpack.c.l.b16 %v1668
    %v1866 = vunpack.c.h.b16 %v1668
    %v1867 = vunpack.c.l.b16 %v1669
    %v1868 = vunpack.c.h.b16 %v1669
    %v1869 = vunpack.c.l.b16 %v1670
    %v1870 = vunpack.c.h.b16 %v1670
    %v1871 = vunpack.c.l.b16 %v1671
    %v1872 = vunpack.c.h.b16 %v1671
    %v1873 = vunpack.c.l.b16 %v1672
    %v1874 = vunpack.c.h.b16 %v1672
    %v1875 = vunpack.c.l.b16 %v1673
    %v1876 = vunpack.c.h.b16 %v1673
    %v1877 = vpack.c.b16 %v1751, %v1749
    %v1878 = vpack.c.b16 %v1752, %v1750
    %v1879 = vpack.c.b16 %v1755, %v1753
    %v1880 = vpack.c.b16 %v1756, %v1754
    %v1881 = vpack.c.b16 %v1759, %v1757
    %v1882 = vpack.c.b16 %v1760, %v1758
    %v1883 = vpack.c.b16 %v1763, %v1761
    %v1884 = vpack.c.b16 %v1764, %v1762
    %v1885 = vpack.c.b16 %v1767, %v1765
    %v1886 = vpack.c.b16 %v1768, %v1766
    %v1887 = vpack.c.b16 %v1771, %v1769
    %v1888 = vpack.c.b16 %v1772, %v1770
    %v1889 = vpack.c.b16 %v1775, %v1773
    %v1890 = vpack.c.b16 %v1776, %v1774
    %v1891 = vpack.c.b16 %v1779, %v1777
    %v1892 = vpack.c.b16 %v1780, %v1778
    %v1893 = vpack.c.b16 %v1783, %v1781
    %v1894 = vpack.c.b16 %v1784, %v1782
    %v1895 = vpack.c.b16 %v1787, %v1785
    %v1896 = vpack.c.b16 %v1788, %v1786
    %v1897 = vpack.c.b16 %v1791, %v1789
    %v1898 = vpack.c.b16 %v1792, %v1790
    %v1899 = vpack.c.b16 %v1795, %v1793
    %v1900 = vpack.c.b16 %v1796, %v1794
    %v1901 = vpack.c.b16 %v1799, %v1797
    %v1902 = vpack.c.b16 %v1800, %v1798
    %v1903 = vpack.c.b16 %v1803, %v1801
    %v1904 = vpack.c.b16 %v1804, %v1802
    %v1905 = vpack.c.b16 %v1807, %v1805
    %v1906 = vpack.c.b16 %v1808, %v1806
    %v1907 = vpack.c.b16 %v1811, %v1809
    %v1908 = vpack.c.b16 %v1812, %v1810
    %v1909 = vpack.c.b16 %v1815, %v1813
    %v1910 = vpack.c.b16 %v1816, %v1814
    %v1911 = vpack.c.b16 %v1819, %v1817
    %v1912 = vpack.c.b16 %v1820, %v1818
    %v1913 = vpack.c.b16 %v1823, %v1821
    %v1914 = vpack.c.b16 %v1824, %v1822
    %v1915 = vpack.c.b16 %v1827, %v1825
    %v1916 = vpack.c.b16 %v1828, %v1826
    %v1917 = vpack.c.b16 %v1831, %v1829
    %v1918 = vpack.c.b16 %v1832, %v1830
    %v1919 = vpack.c.b16 %v1835, %v1833
    %v1920 = vpack.c.b16 %v1836, %v1834
    %v1921 = vpack.c.b16 %v1839, %v1837
    %v1922 = vpack.c.b16 %v1840, %v1838
    %v1923 = vpack.c.b16 %v1843, %v1841
    %v1924 = vpack.c.b16 %v1844, %v1842
    %v1925 = vpack.c.b16 %v1847, %v1845
    %v1926 = vpack.c.b16 %v1848, %v1846
    %v1927 = vpack.c.b16 %v1851, %v1849
    %v1928 = vpack.c.b16 %v1852, %v1850
    %v1929 = vpack.c.b16 %v1855, %v1853
    %v1930 = vpack.c.b16 %v1856, %v1854
    %v1931 = vpack.c.b16 %v1859, %v1857
    %v1932 = vpack.c.b16 %v1860, %v1858
    %v1933 = vpack.c.b16 %v1863, %v1861
    %v1934 = vpack.c.b16 %v1864, %v1862
    %v1935 = vpack.c.b16 %v1867, %v1865
    %v1936 = vpack.c.b16 %v1868, %v1866
    %v1937 = vpack.c.b16 %v1871, %v1869
    %v1938 = vpack.c.b16 %v1872, %v1870
    %v1939 = vpack.c.b16 %v1875, %v1873
    %v1940 = vpack.c.b16 %v1876, %v1874
    %2005 = vmatprep.subr.bf16.mxu0 %v1878
    %2006 = vmatpush1.bf16.msra.mxu0 %v1877
    %2007 = vmatprep.subr.bf16.mxu0 %v1880
    %2008 = vmatpush1.bf16.msra.mxu0 %v1879
    %2009 = vmatprep.subr.bf16.mxu0 %v1882
    %2010 = vmatpush1.bf16.msra.mxu0 %v1881
    %2011 = vmatprep.subr.bf16.mxu0 %v1884
    %2012 = vmatpush1.bf16.msra.mxu0 %v1883
    %2013 = vmatprep.subr.bf16.mxu0 %v1886
    %2014 = vmatpush1.bf16.msra.mxu0 %v1885
    %2015 = vmatprep.subr.bf16.mxu0 %v1888
    %2016 = vmatpush1.bf16.msra.mxu0 %v1887
    %2017 = vmatprep.subr.bf16.mxu0 %v1890
    %2018 = vmatpush1.bf16.msra.mxu0 %v1889
    %2019 = vmatprep.subr.bf16.mxu0 %v1892
    %2020 = vmatpush1.bf16.msra.mxu0 %v1891
    %2021 = vmatprep.subr.bf16.mxu0 %v1894
    %2022 = vmatpush1.bf16.msra.mxu0 %v1893
    %2023 = vmatprep.subr.bf16.mxu0 %v1896
    %2024 = vmatpush1.bf16.msra.mxu0 %v1895
    %2025 = vmatprep.subr.bf16.mxu0 %v1898
    %2026 = vmatpush1.bf16.msra.mxu0 %v1897
    %2027 = vmatprep.subr.bf16.mxu0 %v1900
    %2028 = vmatpush1.bf16.msra.mxu0 %v1899
    %2029 = vmatprep.subr.bf16.mxu0 %v1902
    %2030 = vmatpush1.bf16.msra.mxu0 %v1901
    %2031 = vmatprep.subr.bf16.mxu0 %v1904
    %2032 = vmatpush1.bf16.msra.mxu0 %v1903
    %2033 = vmatprep.subr.bf16.mxu0 %v1906
    %2034 = vmatpush1.bf16.msra.mxu0 %v1905
    %2035 = vmatprep.subr.bf16.mxu0 %v1908
    %2036 = vmatpush1.bf16.msra.mxu0 %v1907
    %2037 = vmatprep.mubr.bf16.mxu0 %v1603
    %2038 = vmatmul.mubr.bf16.gmra.mrb[0].mxu0 %v1602
    %v2039 = vpop.f32.mrb[0].mxu0
    %v2040 = vadd.f32 %v1678, %v2039
    %v2041 = vpop.f32.mrb[0].mxu0
    %v2042 = vadd.f32 %v1682, %v2041
    %v2043 = vpop.f32.mrb[0].mxu0
    %v2044 = vadd.f32 %v1678, %v2043
    %v2045 = vpop.f32.mrb[0].mxu0
    %v2046 = vadd.f32 %v1682, %v2045
    %2047 = vmatprep.mubr.bf16.mxu0 %v1607
    %2048 = vmatmul.mubr.bf16.gmra.mrb[0].mxu0 %v1606
    %v2049 = vpop.f32.mrb[0].mxu0
    %v2050 = vadd.f32 %v1678, %v2049
    %v2051 = vpop.f32.mrb[0].mxu0
    %v2052 = vadd.f32 %v1682, %v2051
    %v2053 = vpop.f32.mrb[0].mxu0
    %v2054 = vpop.f32.mrb[0].mxu0
    %2055 = vdwg.mxu0
    %2056 = vmatprep.subr.bf16.mxu0 %v1910
    %2057 = vmatpush1.bf16.msra.mxu0 %v1909
    %2058 = vmatprep.subr.bf16.mxu0 %v1912
    %2059 = vmatpush1.bf16.msra.mxu0 %v1911
    %2060 = vmatprep.subr.bf16.mxu0 %v1914
    %2061 = vmatpush1.bf16.msra.mxu0 %v1913
    %2062 = vmatprep.subr.bf16.mxu0 %v1916
    %2063 = vmatpush1.bf16.msra.mxu0 %v1915
    %2064 = vmatprep.subr.bf16.mxu0 %v1918
    %2065 = vmatpush1.bf16.msra.mxu0 %v1917
    %2066 = vmatprep.subr.bf16.mxu0 %v1920
    %2067 = vmatpush1.bf16.msra.mxu0 %v1919
    %2068 = vmatprep.subr.bf16.mxu0 %v1922
    %2069 = vmatpush1.bf16.msra.mxu0 %v1921
    %2070 = vmatprep.subr.bf16.mxu0 %v1924
    %2071 = vmatpush1.bf16.msra.mxu0 %v1923
    %2072 = vmatprep.subr.bf16.mxu0 %v1926
    %2073 = vmatpush1.bf16.msra.mxu0 %v1925
    %2074 = vmatprep.subr.bf16.mxu0 %v1928
    %2075 = vmatpush1.bf16.msra.mxu0 %v1927
    %2076 = vmatprep.subr.bf16.mxu0 %v1930
    %2077 = vmatpush1.bf16.msra.mxu0 %v1929
    %2078 = vmatprep.subr.bf16.mxu0 %v1932
    %2079 = vmatpush1.bf16.msra.mxu0 %v1931
    %2080 = vmatprep.subr.bf16.mxu0 %v1934
    %2081 = vmatpush1.bf16.msra.mxu0 %v1933
    %2082 = vmatprep.subr.bf16.mxu0 %v1936
    %2083 = vmatpush1.bf16.msra.mxu0 %v1935
    %2084 = vmatprep.subr.bf16.mxu0 %v1938
    %2085 = vmatpush1.bf16.msra.mxu0 %v1937
    %2086 = vmatprep.subr.bf16.mxu0 %v1940
    %2087 = vmatpush1.bf16.msra.mxu0 %v1939
    %2088 = vmatprep.mubr.bf16.mxu0 %v1605
    %2089 = vmatmul.mubr.bf16.gmra.mrb[0].mxu0 %v1604
    %v2090 = vpop.f32.mrb[0].mxu0
    %v2091 = vadd.f32 %v2040, %v2090
    %v2092 = vpop.f32.mrb[0].mxu0
    %v2093 = vadd.f32 %v2042, %v2092
    %v2094 = vpop.f32.mrb[0].mxu0
    %v2095 = vadd.f32 %v2044, %v2094
    %v2096 = vpop.f32.mrb[0].mxu0
    %v2097 = vadd.f32 %v2046, %v2096
    %2098 = vmatprep.mubr.bf16.mxu0 %v1609
    %2099 = vmatmul.mubr.bf16.gmra.mrb[0].mxu0 %v1608
    %v2100 = vpop.f32.mrb[0].mxu0
    %v2101 = vadd.f32 %v2050, %v2100
    %v2102 = vpop.f32.mrb[0].mxu0
    %v2103 = vadd.f32 %v2052, %v2102
    %v2104 = vpop.f32.mrb[0].mxu0
    %v2105 = vpop.f32.mrb[0].mxu0
    %2106 = vdwg.mxu0
    %v2107 = vmax.f32 %v2091, 0.0
    %v2108 = vmax.f32 %v2093, 0.0
    %v2109 = vmax.f32 %v2095, 0.0
    %v2110 = vmax.f32 %v2097, 0.0
    %v2111 = vmax.f32 %v2101, 0.0
    %v2112 = vmax.f32 %v2103, 0.0
    %v2113 = vpack.c.bf16 %v2109, %v2107
    %v2114 = vpack.c.bf16 %v2110, %v2108
    %v2115 = vpack.c.bf16 %v2111, %v2111
    %v2116 = vpack.c.bf16 %v2112, %v2112
    %v2117 = vld [vmem:[%s13] sm:$0xf]
    %v2118 = vld [vmem:[%s13 + $0x4] sm:$0xf]
    %v2119 = vld [vmem:[%s13 + $0x8] sm:$0xf]
    %v2120 = vld [vmem:[%s13 + $0xc] sm:$0xf]
    %v2121 = vld [vmem:[%s13 + $0x10] sm:$0xf]
    %v2122 = vld [vmem:[%s13 + $0x14] sm:$0xf]
    %v2123 = vld [vmem:[%s13 + $0x18] sm:$0xf]
    %v2124 = vld [vmem:[%s13 + $0x1c] sm:$0xf]
    %v2125 = vld [vmem:[%s13 + $0x20] sm:$0xf]
    %v2126 = vld [vmem:[%s13 + $0x24] sm:$0xf]
    %v2127 = vld [vmem:[%s13 + $0x28] sm:$0xf]
    %v2128 = vld [vmem:[%s13 + $0x2c] sm:$0xf]
    %v2129 = vld [vmem:[%s13 + $0x30] sm:$0xf]
    %v2130 = vld [vmem:[%s13 + $0x34] sm:$0xf]
    %v2131 = vld [vmem:[%s13 + $0x38] sm:$0xf]
    %v2132 = vld [vmem:[%s13 + $0x3c] sm:$0xf]
    %v2133 = vld [vmem:[%s13 + $0x40] sm:$0xf]
    %v2134 = vld [vmem:[%s13 + $0x44] sm:$0xf]
    %v2135 = vld [vmem:[%s13 + $0x48] sm:$0xf]
    %v2136 = vld [vmem:[%s13 + $0x4c] sm:$0xf]
    %v2137 = vld [vmem:[%s13 + $0x50] sm:$0xf]
    %v2138 = vld [vmem:[%s13 + $0x54] sm:$0xf]
    %v2139 = vld [vmem:[%s13 + $0x58] sm:$0xf]
    %v2140 = vld [vmem:[%s13 + $0x5c] sm:$0xf]
    %v2141 = vld [vmem:[%s13 + $0x60] sm:$0xf]
    %v2142 = vld [vmem:[%s13 + $0x64] sm:$0xf]
    %v2143 = vld [vmem:[%s13 + $0x68] sm:$0xf]
    %v2144 = vld [vmem:[%s13 + $0x6c] sm:$0xf]
    %v2145 = vld [vmem:[%s13 + $0x70] sm:$0xf]
    %v2146 = vld [vmem:[%s13 + $0x74] sm:$0xf]
    %v2147 = vld [vmem:[%s13 + $0x78] sm:$0xf]
    %v2148 = vld [vmem:[%s13 + $0x7c] sm:$0xf]
    %v2150 = vlaneseq
    %v2151 = vshrl.u32 %v2150, 7
    %v2152 = vsub.s32 0, %v2151
    %v2153 = vrot.slane %v1337, %v2152
    %v2187 = vunpack.c.l.b16 %v2117
    %v2188 = vunpack.c.l.b16 %v2118
    %v2189 = vunpack.c.l.b16 %v2119
    %v2190 = vunpack.c.l.b16 %v2120
    %v2191 = vunpack.c.l.b16 %v2121
    %v2192 = vunpack.c.l.b16 %v2122
    %v2193 = vunpack.c.l.b16 %v2123
    %v2194 = vunpack.c.l.b16 %v2124
    %v2195 = vunpack.c.l.b16 %v2125
    %v2196 = vunpack.c.l.b16 %v2126
    %v2197 = vunpack.c.l.b16 %v2127
    %v2198 = vunpack.c.l.b16 %v2128
    %v2199 = vunpack.c.l.b16 %v2129
    %v2200 = vunpack.c.l.b16 %v2130
    %v2201 = vunpack.c.l.b16 %v2131
    %v2202 = vunpack.c.l.b16 %v2132
    %v2203 = vunpack.c.l.b16 %v2133
    %v2204 = vunpack.c.l.b16 %v2134
    %v2205 = vunpack.c.l.b16 %v2135
    %v2206 = vunpack.c.l.b16 %v2136
    %v2207 = vunpack.c.l.b16 %v2137
    %v2208 = vunpack.c.l.b16 %v2138
    %v2209 = vunpack.c.l.b16 %v2139
    %v2210 = vunpack.c.l.b16 %v2140
    %v2211 = vunpack.c.l.b16 %v2141
    %v2212 = vunpack.c.l.b16 %v2142
    %v2213 = vunpack.c.l.b16 %v2143
    %v2214 = vunpack.c.l.b16 %v2144
    %v2215 = vunpack.c.l.b16 %v2145
    %v2216 = vunpack.c.l.b16 %v2146
    %v2217 = vunpack.c.l.b16 %v2147
    %v2218 = vunpack.c.l.b16 %v2148
    %v2219 = vpack.c.b16 %v2188, %v2187
    %v2220 = vpack.c.b16 %v2190, %v2189
    %v2221 = vpack.c.b16 %v2192, %v2191
    %v2222 = vpack.c.b16 %v2194, %v2193
    %v2223 = vpack.c.b16 %v2196, %v2195
    %v2224 = vpack.c.b16 %v2198, %v2197
    %v2225 = vpack.c.b16 %v2200, %v2199
    %v2226 = vpack.c.b16 %v2202, %v2201
    %v2227 = vpack.c.b16 %v2204, %v2203
    %v2228 = vpack.c.b16 %v2206, %v2205
    %v2229 = vpack.c.b16 %v2208, %v2207
    %v2230 = vpack.c.b16 %v2210, %v2209
    %v2231 = vpack.c.b16 %v2212, %v2211
    %v2232 = vpack.c.b16 %v2214, %v2213
    %v2233 = vpack.c.b16 %v2216, %v2215
    %v2234 = vpack.c.b16 %v2218, %v2217
    %2251 = vmatprep.subr.bf16.mxu0 0
    %2252 = vmatpush1.bf16.msra.mxu0 %v2219
    %2253 = vmatprep.subr.bf16.mxu0 0
    %2254 = vmatpush1.bf16.msra.mxu0 %v2220
    %2255 = vmatprep.subr.bf16.mxu0 0
    %2256 = vmatpush1.bf16.msra.mxu0 %v2221
    %2257 = vmatprep.subr.bf16.mxu0 0
    %2258 = vmatpush1.bf16.msra.mxu0 %v2222
    %2259 = vmatprep.subr.bf16.mxu0 0
    %2260 = vmatpush1.bf16.msra.mxu0 %v2223
    %2261 = vmatprep.subr.bf16.mxu0 0
    %2262 = vmatpush1.bf16.msra.mxu0 %v2224
    %2263 = vmatprep.subr.bf16.mxu0 0
    %2264 = vmatpush1.bf16.msra.mxu0 %v2225
    %2265 = vmatprep.subr.bf16.mxu0 0
    %2266 = vmatpush1.bf16.msra.mxu0 %v2226
    %2267 = vmatprep.subr.bf16.mxu0 0
    %2268 = vmatpush1.bf16.msra.mxu0 %v2227
    %2269 = vmatprep.subr.bf16.mxu0 0
    %2270 = vmatpush1.bf16.msra.mxu0 %v2228
    %2271 = vmatprep.subr.bf16.mxu0 0
    %2272 = vmatpush1.bf16.msra.mxu0 %v2229
    %2273 = vmatprep.subr.bf16.mxu0 0
    %2274 = vmatpush1.bf16.msra.mxu0 %v2230
    %2275 = vmatprep.subr.bf16.mxu0 0
    %2276 = vmatpush1.bf16.msra.mxu0 %v2231
    %2277 = vmatprep.subr.bf16.mxu0 0
    %2278 = vmatpush1.bf16.msra.mxu0 %v2232
    %2279 = vmatprep.subr.bf16.mxu0 0
    %2280 = vmatpush1.bf16.msra.mxu0 %v2233
    %2281 = vmatprep.subr.bf16.mxu0 0
    %2282 = vmatpush1.bf16.msra.mxu0 %v2234
    %2283 = vmatprep.mubr.bf16.mxu0 %v2114
    %2284 = vmatmul.mubr.bf16.gmra.mrb[0].mxu0 %v2113
    %v2285 = vpop.f32.mrb[0].mxu0
    %v2286 = vadd.f32 %v2153, %v2285
    %v2287 = vpop.f32.mrb[0].mxu0
    %v2288 = vpop.f32.mrb[0].mxu0
    %v2289 = vadd.f32 %v2153, %v2288
    %v2290 = vpop.f32.mrb[0].mxu0
    %2291 = vmatprep.mubr.bf16.mxu0 %v2116
    %2292 = vmatmul.mubr.bf16.gmra.mrb[0].mxu0 %v2115
    %v2293 = vpop.f32.mrb[0].mxu0
    %v2294 = vadd.f32 %v2153, %v2293
    %v2295 = vpop.f32.mrb[0].mxu0
    %v2296 = vpop.f32.mrb[0].mxu0
    %v2297 = vpop.f32.mrb[0].mxu0
    %2298 = vdwg.mxu0
    %v2299 = vmax.f32 %v2286, 0.0
    %v2300 = vmax.f32 %v2289, 0.0
    %v2301 = vmax.f32 %v2294, 0.0
    %v2302 = vpack.c.bf16 %v2300, %v2299
    %v2303 = vpack.c.bf16 %v2301, %v2301
    %v2304 = vld [vmem:[#allocation19] sm:$0xf]
    %v2305 = vld [vmem:[#allocation19 + $0x4] sm:$0xf]
    %v2306 = vld [vmem:[#allocation19 + $0x8] sm:$0xf]
    %v2307 = vld [vmem:[#allocation19 + $0xc] sm:$0xf]
    %v2308 = vld [vmem:[#allocation19 + $0x10] sm:$0xf]
    %v2309 = vld [vmem:[#allocation19 + $0x14] sm:$0xf]
    %v2310 = vld [vmem:[#allocation19 + $0x18] sm:$0xf]
    %v2311 = vld [vmem:[#allocation19 + $0x1c] sm:$0xf]
    %v2313 = vlaneseq
    %v2314 = vshrl.u32 %v2313, 7
    %v2315 = vsub.s32 0, %v2314
    %v2316 = vrot.slane %v1338, %v2315
    %v2326 = vunpack.c.l.b16 %v2304
    %v2327 = vunpack.c.l.b16 %v2305
    %v2328 = vunpack.c.l.b16 %v2306
    %v2329 = vunpack.c.l.b16 %v2307
    %v2330 = vunpack.c.l.b16 %v2308
    %v2331 = vunpack.c.l.b16 %v2309
    %v2332 = vunpack.c.l.b16 %v2310
    %v2333 = vunpack.c.l.b16 %v2311
    %v2334 = vpack.c.b16 %v2327, %v2326
    %v2335 = vpack.c.b16 %v2329, %v2328
    %v2336 = vpack.c.b16 %v2331, %v2330
    %v2337 = vpack.c.b16 %v2333, %v2332
    %v2343 = vsel %vm1247, %v2302, 0
    %v2346 = vsel %vm1247, %v2303, 0
    %2348 = vmatprep.subr.bf16.mxu0 0
    %2349 = vmatpush1.bf16.msra.mxu0 %v2334
    %2350 = vmatprep.subr.bf16.mxu0 0
    %2351 = vmatpush1.bf16.msra.mxu0 %v2335
    %2352 = vmatprep.subr.bf16.mxu0 0
    %2353 = vmatpush1.bf16.msra.mxu0 %v2336
    %2354 = vmatprep.subr.bf16.mxu0 0
    %2355 = vmatpush1.bf16.msra.mxu0 %v2337
    %2356 = vmatprep.subr.bf16.mxu0 0
    %2357 = vmatpush1.bf16.msra.mxu0 0
    %2358 = vmatprep.subr.bf16.mxu0 0
    %2359 = vmatpush1.bf16.msra.mxu0 0
    %2360 = vmatprep.subr.bf16.mxu0 0
    %2361 = vmatpush1.bf16.msra.mxu0 0
    %2362 = vmatprep.subr.bf16.mxu0 0
    %2363 = vmatpush1.bf16.msra.mxu0 0
    %2364 = vmatprep.subr.bf16.mxu0 0
    %2365 = vmatpush1.bf16.msra.mxu0 0
    %2366 = vmatprep.subr.bf16.mxu0 0
    %2367 = vmatpush1.bf16.msra.mxu0 0
    %2368 = vmatprep.subr.bf16.mxu0 0
    %2369 = vmatpush1.bf16.msra.mxu0 0
    %2370 = vmatprep.subr.bf16.mxu0 0
    %2371 = vmatpush1.bf16.msra.mxu0 0
    %2372 = vmatprep.subr.bf16.mxu0 0
    %2373 = vmatpush1.bf16.msra.mxu0 0
    %2374 = vmatprep.subr.bf16.mxu0 0
    %2375 = vmatpush1.bf16.msra.mxu0 0
    %2376 = vmatprep.subr.bf16.mxu0 0
    %2377 = vmatpush1.bf16.msra.mxu0 0
    %2378 = vmatprep.subr.bf16.mxu0 0
    %2379 = vmatpush1.bf16.msra.mxu0 0
    %2380 = vmatprep.mubr.bf16.mxu0 0
    %2381 = vmatmul.mubr.bf16.gmra.mrb[0].mxu0 %v2343
    %v2382 = vpop.f32.mrb[0].mxu0
    %v2383 = vadd.f32 %v2316, %v2382
    %v2384 = vpop.f32.mrb[0].mxu0
    %v2385 = vpop.f32.mrb[0].mxu0
    %v2386 = vadd.f32 %v2316, %v2385
    %v2387 = vpop.f32.mrb[0].mxu0
    %2388 = vmatprep.mubr.bf16.mxu0 0
    %2389 = vmatmul.mubr.bf16.gmra.mrb[0].mxu0 %v2346
    %v2390 = vpop.f32.mrb[0].mxu0
    %v2391 = vadd.f32 %v2316, %v2390
    %v2392 = vpop.f32.mrb[0].mxu0
    %v2393 = vpop.f32.mrb[0].mxu0
    %v2394 = vpop.f32.mrb[0].mxu0
    %2395 = vdwg.mxu0
    %v2396 = vmul.f32 %v2383, 0.5
    %v2397 = vmul.f32 %v2386, 0.5
    %v2398 = vmul.f32 %v2391, 0.5
    %v2399 = vmul.f32 %v2396, 1.442695
    %v2400 = vpow.pop %v2399
    %v2401 = vmul.f32 %v2397, 1.442695
    %v2402 = vpow.pop %v2401
    %v2403 = vmul.f32 %v2398, 1.442695
    %v2404 = vpow.pop %v2403
    %2408 = vrot.lane.b32.xlu0 %v2400, 96
    %v2409 = vpop.permute.xlu0 %2408
    %2410 = vrot.lane.b32.xlu0 %v2402, 96
    %v2411 = vpop.permute.xlu0 %2410
    %2412 = vrot.lane.b32.xlu0 %v2404, 96
    %v2413 = vpop.permute.xlu0 %2412
    %v2417 = vmul.f32 %v1332, %v2409
    %v2418 = vmul.f32 %v1333, %v2411
    %v2419 = vmul.f32 %v1334, %v2413
    %v2420 = vadd.f32 %v2383, %v2417
    %v2421 = vadd.f32 %v2386, %v2418
    %v2422 = vadd.f32 %v2391, %v2419
    %vm2423 = vcmask 261120
    %v2425 = vsel %vm2423, %v1326, 0
    %v2428 = vsel %vm2423, %v2420, 0
    %2430 = vmatprep.subr.mxu0 0.0
    %2431 = vmatpush1.xpose.msra.mxu0 %v2428
    %2432 = vmatprep.subr.mxu0 0.0
    %2433 = vmatpush1.xpose.msra.mxu0 0.0
    %2434 = vmatprep.subr.mxu0 0.0
    %2435 = vmatpush1.xpose.msra.mxu0 0.0
    %2436 = vmatprep.subr.mxu0 0.0
    %2437 = vmatpush1.xpose.msra.mxu0 0.0
    %2438 = vmatprep.subr.mxu0 0.0
    %2439 = vmatpush1.xpose.msra.mxu0 0.0
    %2440 = vmatprep.subr.mxu0 0.0
    %2441 = vmatpush1.xpose.msra.mxu0 0.0
    %2442 = vmatprep.subr.mxu0 0.0
    %2443 = vmatpush1.xpose.msra.mxu0 0.0
    %2444 = vmatprep.subr.mxu0 0.0
    %2445 = vmatpush1.xpose.msra.mxu0 0.0
    %2446 = vmatprep.subr.mxu0 0.0
    %2447 = vmatpush1.xpose.msra.mxu0 0.0
    %2448 = vmatprep.subr.mxu0 0.0
    %2449 = vmatpush1.xpose.msra.mxu0 0.0
    %2450 = vmatprep.subr.mxu0 0.0
    %2451 = vmatpush1.xpose.msra.mxu0 0.0
    %2452 = vmatprep.subr.mxu0 0.0
    %2453 = vmatpush1.xpose.msra.mxu0 0.0
    %2454 = vmatprep.subr.mxu0 0.0
    %2455 = vmatpush1.xpose.msra.mxu0 0.0
    %2456 = vmatprep.subr.mxu0 0.0
    %2457 = vmatpush1.xpose.msra.mxu0 0.0
    %2458 = vmatprep.subr.mxu0 0.0
    %2459 = vmatpush1.xpose.msra.mxu0 0.0
    %2460 = vmatprep.subr.mxu0 0.0
    %2461 = vmatpush1.xpose.msra.mxu0 0.0
    %2462 = vmatprep.subr.mxu0 0.0
    %2463 = vmatpush1.xpose.msra.mxu0 0.0
    %2464 = vmatprep.subr.mxu0 0.0
    %2465 = vmatpush1.xpose.msra.mxu0 0.0
    %2466 = vmatprep.subr.mxu0 0.0
    %2467 = vmatpush1.xpose.msra.mxu0 0.0
    %2468 = vmatprep.subr.mxu0 0.0
    %2469 = vmatpush1.xpose.msra.mxu0 0.0
    %2470 = vmatprep.subr.mxu0 0.0
    %2471 = vmatpush1.xpose.msra.mxu0 0.0
    %2472 = vmatprep.subr.mxu0 0.0
    %2473 = vmatpush1.xpose.msra.mxu0 0.0
    %2474 = vmatprep.subr.mxu0 0.0
    %2475 = vmatpush1.xpose.msra.mxu0 0.0
    %2476 = vmatprep.subr.mxu0 0.0
    %2477 = vmatpush1.xpose.msra.mxu0 0.0
    %2478 = vmatprep.subr.mxu0 0.0
    %2479 = vmatpush1.xpose.msra.mxu0 0.0
    %2480 = vmatprep.subr.mxu0 0.0
    %2481 = vmatpush1.xpose.msra.mxu0 0.0
    %2482 = vmatprep.subr.mxu0 0.0
    %2483 = vmatpush1.xpose.msra.mxu0 0.0
    %2484 = vmatprep.subr.mxu0 0.0
    %2485 = vmatpush1.xpose.msra.mxu0 0.0
    %2486 = vmatprep.subr.mxu0 0.0
    %2487 = vmatpush1.xpose.msra.mxu0 0.0
    %2488 = vmatprep.subr.mxu0 0.0
    %2489 = vmatpush1.xpose.msra.mxu0 0.0
    %2490 = vmatprep.subr.mxu0 0.0
    %2491 = vmatpush1.xpose.msra.mxu0 0.0
    %2492 = vmatprep.subr.mxu0 0.0
    %2493 = vmatpush1.xpose.msra.mxu0 0.0
    %2494 = vmatprep.mubr.f32.mxu0 0.0
    %2495 = vmatmul.mubr.f32.gmra.mrb[0].mxu0 %v2425
    %v2496 = vpop.f32.mrb[0].mxu0
    %v2497 = vadd.f32 0.0, %v2496
    %v2498 = vpop.f32.mrb[0].mxu0
    %2499 = vdwg.mxu0
    %vm2500 = vcmask 37888
    %v2501 = vsel %vm2500, %v2497, inf
    %2502 = vmin.xlane.f32.xlu0 %v2501
    %v2503 = vpop.xlane.xlu0 %2502
    %v2504 = vrot.slane %v2503, 4
    %v2505 = vmin.f32 %v2503, %v2504
    %v2506 = vrot.slane %v2505, 2
    %v2507 = vmin.f32 %v2505, %v2506
    %v2508 = vrot.slane %v2507, 1
    %v2509 = vmin.f32 %v2507, %v2508
    %s2510 = vtos %v2509
    %v2511 = vsel %vm2500, %v2497, -inf
    %2512 = vmax.xlane.f32.xlu0 %v2511
    %v2513 = vpop.xlane.xlu0 %2512
    %v2514 = vrot.slane %v2513, 4
    %v2515 = vmax.f32 %v2513, %v2514
    %v2516 = vrot.slane %v2515, 2
    %v2517 = vmax.f32 %v2515, %v2516
    %v2518 = vrot.slane %v2517, 1
    %v2519 = vmax.f32 %v2517, %v2518
    %s2520 = vtos %v2519
    %v2521 = vstv %s2510
    %v2522 = vsub.f32 %v2497, %v2521
    %s2523 = ssub.f32 %s2520, %s2510
    %s2524 = smax.f32 %s2523, 1e-12
    %v2525 = vstv %s2524
    %v2526 = vrcp.pop %v2525
    %v2527 = vmul.f32 %v2522, %v2526
    %2528 = vst.msk [vmem:[#allocation22] sm:$0x3f] %vm2500, %v2527
    %v2529 = vmul.f32 %v1327, %v1327
    %vm2530 = vcmask 257024
    %v2531 = vsel %vm2530, %v2529, 0.0
    %2532 = vadd.xlane.f32.xlu0 %v2531
    %v2533 = vpop.xlane.xlu0 %2532
    %v2534 = vmax.f32 %v2533, 1e-24
    %v2535 = vrsqrt.pop %v2534
    %v2536 = vmul.f32 %v1327, %v2535
    %v2537 = vmul.f32 %v1328, %v1328
    %v2538 = vsel %vm2530, %v2537, 0.0
    %2539 = vadd.xlane.f32.xlu0 %v2538
    %v2540 = vpop.xlane.xlu0 %2539
    %v2541 = vmax.f32 %v2540, 1e-24
    %v2542 = vrsqrt.pop %v2541
    %v2543 = vmul.f32 %v1328, %v2542
    %v2544 = vmul.f32 %v2421, %v2421
    %v2545 = vsel %vm2530, %v2544, 0.0
    %2546 = vadd.xlane.f32.xlu0 %v2545
    %v2547 = vpop.xlane.xlu0 %2546
    %v2548 = vmax.f32 %v2547, 1e-24
    %v2549 = vrsqrt.pop %v2548
    %v2550 = vmul.f32 %v2421, %v2549
    %v2551 = vmul.f32 %v2422, %v2422
    %v2552 = vsel %vm2530, %v2551, 0.0
    %2553 = vadd.xlane.f32.xlu0 %v2552
    %v2554 = vpop.xlane.xlu0 %2553
    %v2555 = vmax.f32 %v2554, 1e-24
    %v2556 = vrsqrt.pop %v2555
    %v2557 = vmul.f32 %v2422, %v2556
    %v2558 = vmul.f32 %v2536, %v2550
    %v2559 = vsel %vm2530, %v2558, 0.0
    %2560 = vadd.xlane.f32.xlu0 %v2559
    %v2561 = vpop.xlane.xlu0 %2560
    %v2562 = vmul.f32 %v2536, %v2557
    %v2563 = vsel %vm2530, %v2562, 0.0
    %2564 = vadd.xlane.f32.xlu0 %v2563
    %v2565 = vpop.xlane.xlu0 %2564
    %v2566 = vmul.f32 %v2543, %v2550
    %v2567 = vsel %vm2530, %v2566, 0.0
    %2568 = vadd.xlane.f32.xlu0 %v2567
    %v2569 = vpop.xlane.xlu0 %2568
    %v2570 = vsub.f32 %v2565, %v2561
    %v2571 = vmul.f32 %v2570, 1.442695
    %v2572 = vpow.pop %v2571
    %v2573 = vadd.f32 %v2572, 1.0
    %v2574 = vsub.f32 %v2569, %v2561
    %v2575 = vmul.f32 %v2574, 1.442695
    %v2576 = vpow.pop %v2575
    %v2577 = vadd.f32 %v2573, %v2576
    %v2578 = vlog2.pop %v2577
    %v2579 = vmul.f32 %v2578, 0.6931472
    %vm2580 = vcmask 3072
    %v2581 = vsel %vm2580, %v2579, 0.0
    %2582 = vadd.xlane.f32.xlu0 %v2581
    %v2583 = vpop.xlane.xlu0 %2582
    %v2584 = vrot.slane %v2583, 4
    %v2585 = vadd.f32 %v2583, %v2584
    %v2586 = vrot.slane %v2585, 2
    %v2587 = vadd.f32 %v2585, %v2586
    %v2588 = vrot.slane %v2587, 1
    %v2589 = vadd.f32 %v2587, %v2588
    %s2590 = vtos %v2589
    %v2591 = vrcp.pop 4.0
    %s2592 = vtos %v2591
    %s2593 = smul.f32 %s2590, %s2592
    %s2594 = scalar_lea.smem [#allocation23], 0
    %2595 = sst [smem:[%s2594]] %s2593
    // Predicated region
    $region114: #{micro_disease_v3_copy_forward.1} parent=1 // pred_check
      _
    $region115: #{micro_disease_v3_copy_forward.1} parent=1 // pred_check_branch
      %2597 = sbr.rel (0) target = $region117
    $region116: #{micro_disease_v3_copy_forward.1} parent=1 // pred_region
      %s2599 = ssub.s32 128, 128
      %2600 = vsyncadd [#allocation6], %s2599
      %s2602 = sshll.u32 [#allocation22], 4
      %s2603 = int_to_ptr.vmem [resolvable:$true] %s2602
      %2605 = dma.vmem_to_hbm [thread:$0]  %s2603, 128, %s18, [#allocation6]
    $region117: #{micro_disease_v3_copy_forward.1} parent=1 // pred_fallthru
      _
    // Predicated region
    $region118: #{micro_disease_v3_copy_forward.1} parent=1 // pred_check
      _
    $region119: #{micro_disease_v3_copy_forward.1} parent=1 // pred_check_branch
      %2607 = sbr.rel (0) target = $region121
    $region120: #{micro_disease_v3_copy_forward.1} parent=1 // pred_region
      %s2609 = ssub.s32 16, 16
      %2610 = vsyncadd [#allocation7], %s2609
      %2613 = dma.smem_to_hbm [#allocation23], 16, %s19, [#allocation7]
    $region121: #{micro_disease_v3_copy_forward.1} parent=1 // pred_fallthru
      _
    // Predicated region
    $region122: #{micro_disease_v3_copy_forward.1} parent=1 // pred_check
      _
    $region123: #{micro_disease_v3_copy_forward.1} parent=1 // pred_check_branch
      %2615 = sbr.rel (0) target = $region125
    $region124: #{micro_disease_v3_copy_forward.1} parent=1 // pred_region
      %2616 = dma.done [#allocation6], 128
    $region125: #{micro_disease_v3_copy_forward.1} parent=1 // pred_fallthru
      _
    // Predicated region
    $region126: #{micro_disease_v3_copy_forward.1} parent=1 // pred_check
      _
    $region127: #{micro_disease_v3_copy_forward.1} parent=1 // pred_check_branch
      %2618 = sbr.rel (0) target = $region129
    $region128: #{micro_disease_v3_copy_forward.1} parent=1 // pred_region
      %2619 = dma.done [#allocation7], 16
    $region129: #{micro_disease_v3_copy_forward.1} parent=1 // pred_fallthru
      _
    %2620 = sfence
    %2621 = vsyncpa [#allocation5], 1
    %2622 = vsyncpa [#allocation9], 1
    %2623 = vsyncpa [#allocation12], 1
    %2624 = vsyncpa [#allocation15], 1
    %2625 = vsyncpa [#allocation18], 1
    %2626 = vsyncpa [#allocation21], 1
    %2627 = vsyncpa [#allocation6], 1
    %2628 = vsyncpa [#allocation7], 1

</llo_original>
